<compile_context>
chip_gen: v5e
topology: v5e:2x2
jax: 0.10.0
libtpu: 0.0.40
codegen_flags: <defaults>
</compile_context>

<pallas_src>
import functools

import jax
import jax.numpy as jnp
from jax import lax
from jax.experimental import pallas as pl
from jax.experimental.pallas import tpu as pltpu

EPS = 1e-5  # nn.InstanceNorm3d default


def _round_up(x, m):
    return (x + m - 1) // m * m


def _fused_kernel(mask_ref, x0_ref, x1_ref, w_ref, gamma_ref, beta_ref,
                  out_ref, sum_sc, sq_sc, *, tap_offsets, tile, halo, inv_n,
                  eps):
    """One (sample, phase, spatial-tile) grid step.

    mask_ref:   (1, tile)            1.0 on valid output lanes of this tile
    x0_ref:     (1, C_in_p, tile)    input chunk t (padded flat spatial grid)
    x1_ref:     (1, C_in_p, tile)    input chunk t+1 (forward halo)
    w_ref:      (C_out_p, K)         K = k^3 * C_in_p, tap-major
    gamma/beta: (C_out_p, 1)
    out_ref:    (1, C_out_p, tile)
    sum_sc/sq_sc: (C_out_p, 1) f32   per-channel running sum / sum-of-squares
    """
    phase = pl.program_id(1)
    t = pl.program_id(2)

    # --- Conv3d for this output tile (both phases need it) -------------------
    # Window = current chunk + halo lanes of the next chunk; every tap is a
    # static lane-offset slice of the window.  One MXU GEMM per tile.
    c0 = x0_ref[0]                                   # (C_in_p, tile)
    c1 = x1_ref[0]                                   # (C_in_p, tile)
    window = jnp.concatenate([c0, c1[:, :halo]], axis=1)   # (C_in_p, tile+halo)
    patch = jnp.concatenate(
        [window[:, off:off + tile] for off in tap_offsets], axis=0)  # (K, tile)
    y = jnp.dot(w_ref[...], patch,
                preferred_element_type=jnp.float32)   # (C_out_p, tile) f32

    # --- Phase 0: accumulate per-channel instance-norm statistics ------------
    @pl.when((phase == 0) & (t == 0))
    def _init():
        sum_sc[...] = jnp.zeros_like(sum_sc)
        sq_sc[...] = jnp.zeros_like(sq_sc)

    @pl.when(phase == 0)
    def _stats():
        ym = y * mask_ref[...]            # exclude grid-padding / tail lanes
        sum_sc[...] += jnp.sum(ym, axis=1, keepdims=True)
        sq_sc[...] += jnp.sum(ym * y, axis=1, keepdims=True)

    # --- Phase 1: normalize + affine + ReLU, write the tile ------------------
    @pl.when(phase == 1)
    def _normalize():
        mean = sum_sc[...] * inv_n
        var = jnp.maximum(sq_sc[...] * inv_n - mean * mean, 0.0)  # clamp
        scale = gamma_ref[...] * lax.rsqrt(var + eps)             # EUP
        shift = beta_ref[...] - mean * scale
        out_ref[0] = jnp.maximum(y * scale + shift, 0.0).astype(out_ref.dtype)


def _vmem_limit_bytes():
    # ~3/4 of physical VMEM (64 MiB on v7x, 128 MiB on v5e/v6e), capped.
    cap = 64 * 1024 * 1024
    try:
        cap = int(pltpu.get_tpu_info().vmem_capacity_bytes)
    except Exception:
        pass
    return int(min(cap * 3 // 4, 100 * 1024 * 1024))


def basic_conv3d(x, conv_weight, gamma, beta, *, padding=1,
                 compute_dtype=jnp.bfloat16, out_dtype=None, tile=512):
    """Fused BasicConv3d forward (stride-1 Conv3d -> InstanceNorm3d -> ReLU).

    x: (N, C_in, D, H, W); conv_weight: (C_out, C_in, k, k, k);
    gamma, beta: (C_out,).  Returns (N, C_out, D_out, H_out, W_out).
    """
    N, C_in, D, H, W = x.shape
    C_out, _, k, _, _ = conv_weight.shape
    p = padding
    out_dtype = x.dtype if out_dtype is None else out_dtype

    Dp, Hp, Wp = D + 2 * p, H + 2 * p, W + 2 * p
    D_out, H_out, W_out = Dp - k + 1, Hp - k + 1, Wp - k + 1
    S = Dp * Hp * Wp                         # padded-grid flat spatial (lanes)

    C_in_p = _round_up(C_in, 8)
    C_out_p = _round_up(C_out, 8)

    max_off = (k - 1) * (Hp * Wp + Wp + 1)   # largest tap lane offset
    halo = _round_up(max_off, 128)
    tile = min(tile, _round_up(S, 128))
    tile = max(tile, halo)                   # halo must fit in the next chunk
    T = pl.cdiv(S, tile)
    S_p = T * tile                           # lanes covered by output tiles
    S_in_p = (T + 1) * tile                  # input lanes incl. final halo chunk

    # Input: cast to compute dtype FIRST, then pad channels + spatial + lane
    # tail in one materialization (no f32 im2col, no 27x patch blowup).
    xq = x.astype(compute_dtype)
    xq = jnp.pad(xq, ((0, 0), (0, C_in_p - C_in), (p, p), (p, p), (p, p)))
    xq = xq.reshape(N, C_in_p, S)
    xq = jnp.pad(xq, ((0, 0), (0, 0), (0, S_in_p - S)))

    # Weights: (C_out, C_in, k,k,k) -> tap-major (C_out_p, k^3*C_in_p), matching
    # the order the kernel concatenates tap windows (dz, dy, dx, c_in).
    w5 = jnp.pad(conv_weight.astype(jnp.float32),
                 ((0, C_out_p - C_out), (0, C_in_p - C_in),
                  (0, 0), (0, 0), (0, 0)))
    K = k * k * k * C_in_p
    w_full = jnp.transpose(w5, (0, 2, 3, 4, 1)).reshape(C_out_p, K)
    w_full = w_full.astype(compute_dtype)

    # Per-lane validity mask over the padded output grid: instance-norm stats
    # only see the true D_out*H_out*W_out positions.
    lane = jnp.arange(S_p, dtype=jnp.int32)
    bd = lane // (Hp * Wp)
    bh = (lane // Wp) % Hp
    bw = lane % Wp
    valid = (bd < D_out) & (bh < H_out) & (bw < W_out) & (lane < S)
    mask = valid.astype(jnp.float32).reshape(1, S_p)

    # Padded output channels: gamma=1, beta=0 -> their all-zero rows stay zero.
    gamma2 = jnp.pad(gamma.astype(jnp.float32), (0, C_out_p - C_out),
                     constant_values=1.0).reshape(C_out_p, 1)
    beta2 = jnp.pad(beta.astype(jnp.float32),
                    (0, C_out_p - C_out)).reshape(C_out_p, 1)

    tap_offsets = tuple(dz * Hp * Wp + dy * Wp + dx
                        for dz in range(k) for dy in range(k)
                        for dx in range(k))
    n_valid = D_out * H_out * W_out

    kernel = functools.partial(
        _fused_kernel, tap_offsets=tap_offsets, tile=tile, halo=halo,
        inv_n=1.0 / n_valid, eps=EPS)

    cd_size = jnp.dtype(compute_dtype).itemsize
    out_size = jnp.dtype(out_dtype).itemsize
    cost = pl.CostEstimate(
        flops=2 * 2 * N * T * tile * K * C_out_p,           # two sweeps
        transcendentals=N * T * C_out_p,
        bytes_accessed=(4 * N * C_in_p * S_p * cd_size      # x chunks (2 streams x 2 phases)
                        + C_out_p * K * cd_size             # weights
                        + 2 * N * T * tile * 4              # mask
                        + N * C_out_p * S_p * out_size))    # output

    out = pl.pallas_call(
        kernel,
        out_shape=jax.ShapeDtypeStruct((N, C_out_p, S_p), out_dtype),
        grid_spec=pltpu.PrefetchScalarGridSpec(
            num_scalar_prefetch=0,
            grid=(N, 2, T),                      # sample, phase, spatial tile
            in_specs=[
                pl.BlockSpec((1, tile), lambda n, ph, t: (0, t)),          # mask
                pl.BlockSpec((1, C_in_p, tile), lambda n, ph, t: (n, 0, t)),      # x chunk t
                pl.BlockSpec((1, C_in_p, tile), lambda n, ph, t: (n, 0, t + 1)),  # x chunk t+1 (halo)
                pl.BlockSpec((C_out_p, K), lambda n, ph, t: (0, 0)),       # weights (resident)
                pl.BlockSpec((C_out_p, 1), lambda n, ph, t: (0, 0)),       # gamma
                pl.BlockSpec((C_out_p, 1), lambda n, ph, t: (0, 0)),       # beta
            ],
            # Phase 0 never writes; keep its output block index pinned at
            # (n, 0, 0) so the only HBM writebacks are phase-1's finished tiles
            # and every block's visits stay consecutive.
            out_specs=pl.BlockSpec((1, C_out_p, tile),
                                   lambda n, ph, t: (n, 0, t * ph)),
            scratch_shapes=[pltpu.VMEM((C_out_p, 1), jnp.float32),
                            pltpu.VMEM((C_out_p, 1), jnp.float32)],
        ),
        compiler_params=pltpu.CompilerParams(
            dimension_semantics=("parallel", "arbitrary", "arbitrary"),
            vmem_limit_bytes=_vmem_limit_bytes()),
        cost_estimate=cost,
    )(mask, xq, xq, w_full, gamma2, beta2)

    # Crop channel padding + padded-grid / lane-tail positions (see TODO above).
    out = out[:, :C_out, :S].reshape(N, C_out, Dp, Hp, Wp)
    return out[:, :, :D_out, :H_out, :W_out]


def _reference(x, conv_weight, gamma, beta, *, padding=1):
    y = lax.conv_general_dilated(
        x.astype(jnp.float32), conv_weight.astype(jnp.float32),
        window_strides=(1, 1, 1),
        padding=[(padding, padding)] * 3,
        dimension_numbers=("NCDHW", "OIDHW", "NCDHW"),
        precision=lax.Precision.HIGHEST)
    mean = jnp.mean(y, axis=(2, 3, 4), keepdims=True)
    var = jnp.mean((y - mean) ** 2, axis=(2, 3, 4), keepdims=True)
    y = (y - mean) / jnp.sqrt(var + EPS)
    y = y * gamma.reshape(1, -1, 1, 1, 1) + beta.reshape(1, -1, 1, 1, 1)
    return jnp.maximum(y, 0.0)


if __name__ == "__main__":
    key = jax.random.PRNGKey(0)
    k_x, k_w, k_g, k_b = jax.random.split(key, 4)

    # Small shapes consistent with the module: N=2, C_in=4, C_out=8, D=H=W=8,
    # kernel_size=3, padding=1, stride=1.
    N, C_in, C_out, D, H, W, k = 2, 4, 8, 8, 8, 8, 3

    x = jax.random.normal(k_x, (N, C_in, D, H, W), dtype=jnp.float32)
    fan_in = C_in * k * k * k
    conv_w = jax.random.normal(k_w, (C_out, C_in, k, k, k),
                               dtype=jnp.float32) * (2.0 / fan_in) ** 0.5
    gamma = 1.0 + 0.1 * jax.random.normal(k_g, (C_out,), dtype=jnp.float32)
    beta = 0.1 * jax.random.normal(k_b, (C_out,), dtype=jnp.float32)

    ref = _reference(x, conv_w, gamma, beta, padding=1)

    # f32 compute / f32 output: checks the fused conv + two-phase norm logic.
    out_f32 = jax.block_until_ready(
        basic_conv3d(x, conv_w, gamma, beta, padding=1,
                     compute_dtype=jnp.float32, out_dtype=jnp.float32))
    assert out_f32.shape == ref.shape, (out_f32.shape, ref.shape)
    err_f32 = float(jnp.max(jnp.abs(out_f32 - ref)))
    assert err_f32 < 2e-2, f"f32 path max abs err {err_f32}"

    # bf16 compute / bf16 output (production default): looser tolerance.
    out_bf16 = jax.block_until_ready(
        basic_conv3d(x, conv_w, gamma, beta, padding=1,
                     compute_dtype=jnp.bfloat16, out_dtype=jnp.bfloat16))
    assert out_bf16.shape == ref.shape, (out_bf16.shape, ref.shape)
    err_bf16 = float(jnp.max(jnp.abs(out_bf16.astype(jnp.float32) - ref)))
    assert err_bf16 < 1e-1, f"bf16 path max abs err {err_bf16}"

    print("KERNEL_OK")
</pallas_src>

<mosaic_0001>
module attributes {stable_mosaic.version = 11 : i64} {
  func.func @_fused_kernel(%arg0: i32, %arg1: i32, %arg2: i32, %arg3: memref<1x512xf32, #tpu.memory_space<vmem>>, %arg4: memref<1x8x512xf32, #tpu.memory_space<vmem>>, %arg5: memref<1x8x512xf32, #tpu.memory_space<vmem>>, %arg6: memref<8x216xf32, #tpu.memory_space<vmem>>, %arg7: memref<8x1xf32, #tpu.memory_space<vmem>>, %arg8: memref<8x1xf32, #tpu.memory_space<vmem>>, %arg9: memref<1x8x512xf32, #tpu.memory_space<vmem>>, %arg10: memref<8x1xf32, #tpu.memory_space<vmem>>, %arg11: memref<8x1xf32, #tpu.memory_space<vmem>>) attributes {dimension_semantics = [#tpu.dimension_semantics<parallel>, #tpu.dimension_semantics<arbitrary>, #tpu.dimension_semantics<arbitrary>], iteration_bounds = array<i64: 2, 2, 2>, scalar_prefetch = 0 : i64, scratch_operands = 2 : i64, tpu.core_type = #tpu.core_type<tc>, window_params = [{transform_indices = @transform_0, window_bounds = array<i64: 1, 512>}, {transform_indices = @transform_1, window_bounds = array<i64: 1, 8, 512>}, {transform_indices = @transform_2, window_bounds = array<i64: 1, 8, 512>}, {pipeline_mode = #tpu.pipeline_mode<synchronous>, transform_indices = @transform_3, window_bounds = array<i64: 8, 216>}, {pipeline_mode = #tpu.pipeline_mode<synchronous>, transform_indices = @transform_4, window_bounds = array<i64: 8, 1>}, {pipeline_mode = #tpu.pipeline_mode<synchronous>, transform_indices = @transform_5, window_bounds = array<i64: 8, 1>}, {transform_indices = @transform_6, window_bounds = array<i64: 1, 8, 512>}]} {
    %c0 = arith.constant 0 : index
    %c0_0 = arith.constant 0 : index
    %c0_1 = arith.constant 0 : index
    %0 = vector.load %arg4[%c0, %c0_0, %c0_1] : memref<1x8x512xf32, #tpu.memory_space<vmem>>, vector<1x8x512xf32>
    %1 = vector.shape_cast %0 : vector<1x8x512xf32> to vector<8x512xf32>
    %c0_2 = arith.constant 0 : index
    %c0_3 = arith.constant 0 : index
    %c0_4 = arith.constant 0 : index
    %2 = vector.load %arg5[%c0_2, %c0_3, %c0_4] : memref<1x8x512xf32, #tpu.memory_space<vmem>>, vector<1x8x512xf32>
    %3 = vector.shape_cast %2 : vector<1x8x512xf32> to vector<8x512xf32>
    %4 = vector.extract_strided_slice %3 {offsets = [0, 0], sizes = [8, 256], strides = [1, 1]} : vector<8x512xf32> to vector<8x256xf32>
    %5 = tpu.concatenate %1, %4 in 1 : vector<8x512xf32>, vector<8x256xf32> -> vector<8x768xf32>
    %6 = vector.extract_strided_slice %5 {offsets = [0, 0], sizes = [8, 512], strides = [1, 1]} : vector<8x768xf32> to vector<8x512xf32>
    %7 = vector.extract_strided_slice %5 {offsets = [0, 1], sizes = [8, 512], strides = [1, 1]} : vector<8x768xf32> to vector<8x512xf32>
    %8 = vector.extract_strided_slice %5 {offsets = [0, 2], sizes = [8, 512], strides = [1, 1]} : vector<8x768xf32> to vector<8x512xf32>
    %9 = vector.extract_strided_slice %5 {offsets = [0, 10], sizes = [8, 512], strides = [1, 1]} : vector<8x768xf32> to vector<8x512xf32>
    %10 = vector.extract_strided_slice %5 {offsets = [0, 11], sizes = [8, 512], strides = [1, 1]} : vector<8x768xf32> to vector<8x512xf32>
    %11 = vector.extract_strided_slice %5 {offsets = [0, 12], sizes = [8, 512], strides = [1, 1]} : vector<8x768xf32> to vector<8x512xf32>
    %12 = vector.extract_strided_slice %5 {offsets = [0, 20], sizes = [8, 512], strides = [1, 1]} : vector<8x768xf32> to vector<8x512xf32>
    %13 = vector.extract_strided_slice %5 {offsets = [0, 21], sizes = [8, 512], strides = [1, 1]} : vector<8x768xf32> to vector<8x512xf32>
    %14 = vector.extract_strided_slice %5 {offsets = [0, 22], sizes = [8, 512], strides = [1, 1]} : vector<8x768xf32> to vector<8x512xf32>
    %15 = vector.extract_strided_slice %5 {offsets = [0, 100], sizes = [8, 512], strides = [1, 1]} : vector<8x768xf32> to vector<8x512xf32>
    %16 = vector.extract_strided_slice %5 {offsets = [0, 101], sizes = [8, 512], strides = [1, 1]} : vector<8x768xf32> to vector<8x512xf32>
    %17 = vector.extract_strided_slice %5 {offsets = [0, 102], sizes = [8, 512], strides = [1, 1]} : vector<8x768xf32> to vector<8x512xf32>
    %18 = vector.extract_strided_slice %5 {offsets = [0, 110], sizes = [8, 512], strides = [1, 1]} : vector<8x768xf32> to vector<8x512xf32>
    %19 = vector.extract_strided_slice %5 {offsets = [0, 111], sizes = [8, 512], strides = [1, 1]} : vector<8x768xf32> to vector<8x512xf32>
    %20 = vector.extract_strided_slice %5 {offsets = [0, 112], sizes = [8, 512], strides = [1, 1]} : vector<8x768xf32> to vector<8x512xf32>
    %21 = vector.extract_strided_slice %5 {offsets = [0, 120], sizes = [8, 512], strides = [1, 1]} : vector<8x768xf32> to vector<8x512xf32>
    %22 = vector.extract_strided_slice %5 {offsets = [0, 121], sizes = [8, 512], strides = [1, 1]} : vector<8x768xf32> to vector<8x512xf32>
    %23 = vector.extract_strided_slice %5 {offsets = [0, 122], sizes = [8, 512], strides = [1, 1]} : vector<8x768xf32> to vector<8x512xf32>
    %24 = vector.extract_strided_slice %5 {offsets = [0, 200], sizes = [8, 512], strides = [1, 1]} : vector<8x768xf32> to vector<8x512xf32>
    %25 = vector.extract_strided_slice %5 {offsets = [0, 201], sizes = [8, 512], strides = [1, 1]} : vector<8x768xf32> to vector<8x512xf32>
    %26 = vector.extract_strided_slice %5 {offsets = [0, 202], sizes = [8, 512], strides = [1, 1]} : vector<8x768xf32> to vector<8x512xf32>
    %27 = vector.extract_strided_slice %5 {offsets = [0, 210], sizes = [8, 512], strides = [1, 1]} : vector<8x768xf32> to vector<8x512xf32>
    %28 = vector.extract_strided_slice %5 {offsets = [0, 211], sizes = [8, 512], strides = [1, 1]} : vector<8x768xf32> to vector<8x512xf32>
    %29 = vector.extract_strided_slice %5 {offsets = [0, 212], sizes = [8, 512], strides = [1, 1]} : vector<8x768xf32> to vector<8x512xf32>
    %30 = vector.extract_strided_slice %5 {offsets = [0, 220], sizes = [8, 512], strides = [1, 1]} : vector<8x768xf32> to vector<8x512xf32>
    %31 = vector.extract_strided_slice %5 {offsets = [0, 221], sizes = [8, 512], strides = [1, 1]} : vector<8x768xf32> to vector<8x512xf32>
    %32 = vector.extract_strided_slice %5 {offsets = [0, 222], sizes = [8, 512], strides = [1, 1]} : vector<8x768xf32> to vector<8x512xf32>
    %33 = tpu.concatenate %6, %7, %8, %9, %10, %11, %12, %13, %14, %15, %16, %17, %18, %19, %20, %21 in 0 : vector<8x512xf32>, vector<8x512xf32>, vector<8x512xf32>, vector<8x512xf32>, vector<8x512xf32>, vector<8x512xf32>, vector<8x512xf32>, vector<8x512xf32>, vector<8x512xf32>, vector<8x512xf32>, vector<8x512xf32>, vector<8x512xf32>, vector<8x512xf32>, vector<8x512xf32>, vector<8x512xf32>, vector<8x512xf32> -> vector<128x512xf32>
    %34 = tpu.concatenate %22, %23, %24, %25, %26, %27, %28, %29, %30, %31, %32 in 0 : vector<8x512xf32>, vector<8x512xf32>, vector<8x512xf32>, vector<8x512xf32>, vector<8x512xf32>, vector<8x512xf32>, vector<8x512xf32>, vector<8x512xf32>, vector<8x512xf32>, vector<8x512xf32>, vector<8x512xf32> -> vector<88x512xf32>
    %35 = tpu.concatenate %33, %34 in 0 : vector<128x512xf32>, vector<88x512xf32> -> vector<216x512xf32>
    %c0_5 = arith.constant 0 : index
    %c0_6 = arith.constant 0 : index
    %36 = vector.load %arg6[%c0_5, %c0_6] : memref<8x216xf32, #tpu.memory_space<vmem>>, vector<8x216xf32>
    %cst = arith.constant dense<0.000000e+00> : vector<8x512xf32>
    %37 = tpu.matmul %36, %35, %cst {dimension_numbers = #tpu.dot_dimension_numbers<[1], [0], [0], [1], [0, 0, 1, 1], [], []>} : vector<8x216xf32>, vector<216x512xf32>, vector<8x512xf32> -> vector<8x512xf32>
    %c0_i32 = arith.constant 0 : i32
    %38 = arith.cmpi eq, %arg1, %c0_i32 : i32
    %c0_i32_7 = arith.constant 0 : i32
    %39 = arith.cmpi eq, %arg2, %c0_i32_7 : i32
    %40 = arith.andi %38, %39 : i1
    %41 = arith.extui %40 : i1 to i32
    %c0_i32_8 = arith.constant 0 : i32
    %42 = arith.cmpi ne, %41, %c0_i32_8 : i32
    scf.if %42 {
      %cst_12 = arith.constant 0.000000e+00 : f32
      %49 = vector.broadcast %cst_12 : f32 to vector<8x1xf32>
      %c0_13 = arith.constant 0 : index
      %c0_14 = arith.constant 0 : index
      %50 = vector.load %arg10[%c0_13, %c0_14] : memref<8x1xf32, #tpu.memory_space<vmem>>, vector<8x1xf32>
      tpu.vector_store %arg10[%c0_13, %c0_14], %49 {strides = array<i32>} : memref<8x1xf32, #tpu.memory_space<vmem>>, vector<8x1xf32>,
      %cst_15 = arith.constant 0.000000e+00 : f32
      %51 = vector.broadcast %cst_15 : f32 to vector<8x1xf32>
      %c0_16 = arith.constant 0 : index
      %c0_17 = arith.constant 0 : index
      %52 = vector.load %arg11[%c0_16, %c0_17] : memref<8x1xf32, #tpu.memory_space<vmem>>, vector<8x1xf32>
      tpu.vector_store %arg11[%c0_16, %c0_17], %51 {strides = array<i32>} : memref<8x1xf32, #tpu.memory_space<vmem>>, vector<8x1xf32>,
    } else {
    }
    %c0_i32_9 = arith.constant 0 : i32
    %43 = arith.cmpi eq, %arg1, %c0_i32_9 : i32
    %44 = arith.extui %43 : i1 to i32
    %c0_i32_10 = arith.constant 0 : i32
    %45 = arith.cmpi ne, %44, %c0_i32_10 : i32
    scf.if %45 {
      %c0_12 = arith.constant 0 : index
      %c0_13 = arith.constant 0 : index
      %49 = vector.load %arg3[%c0_12, %c0_13] : memref<1x512xf32, #tpu.memory_space<vmem>>, vector<1x512xf32>
      %50 = vector.broadcast %49 : vector<1x512xf32> to vector<8x512xf32>
      %51 = arith.mulf %37, %50 : vector<8x512xf32>
      %c0_14 = arith.constant 0 : index
      %c0_15 = arith.constant 0 : index
      %52 = vector.load %arg10[%c0_14, %c0_15] : memref<8x1xf32, #tpu.memory_space<vmem>>, vector<8x1xf32>
      %cst_16 = arith.constant dense<0.000000e+00> : vector<8xf32>
      %53 = vector.multi_reduction <add>, %51, %cst_16 [1] : vector<8x512xf32> to vector<8xf32>
      %54 = vector.shape_cast %53 : vector<8xf32> to vector<8x1xf32>
      %55 = arith.addf %52, %54 : vector<8x1xf32>
      %c0_17 = arith.constant 0 : index
      %c0_18 = arith.constant 0 : index
      %56 = vector.load %arg10[%c0_17, %c0_18] : memref<8x1xf32, #tpu.memory_space<vmem>>, vector<8x1xf32>
      tpu.vector_store %arg10[%c0_17, %c0_18], %55 {strides = array<i32>} : memref<8x1xf32, #tpu.memory_space<vmem>>, vector<8x1xf32>,
      %c0_19 = arith.constant 0 : index
      %c0_20 = arith.constant 0 : index
      %57 = vector.load %arg11[%c0_19, %c0_20] : memref<8x1xf32, #tpu.memory_space<vmem>>, vector<8x1xf32>
      %58 = arith.mulf %51, %37 : vector<8x512xf32>
      %cst_21 = arith.constant dense<0.000000e+00> : vector<8xf32>
      %59 = vector.multi_reduction <add>, %58, %cst_21 [1] : vector<8x512xf32> to vector<8xf32>
      %60 = vector.shape_cast %59 : vector<8xf32> to vector<8x1xf32>
      %61 = arith.addf %57, %60 : vector<8x1xf32>
      %c0_22 = arith.constant 0 : index
      %c0_23 = arith.constant 0 : index
      %62 = vector.load %arg11[%c0_22, %c0_23] : memref<8x1xf32, #tpu.memory_space<vmem>>, vector<8x1xf32>
      tpu.vector_store %arg11[%c0_22, %c0_23], %61 {strides = array<i32>} : memref<8x1xf32, #tpu.memory_space<vmem>>, vector<8x1xf32>,
    } else {
    }
    %c1_i32 = arith.constant 1 : i32
    %46 = arith.cmpi eq, %arg1, %c1_i32 : i32
    %47 = arith.extui %46 : i1 to i32
    %c0_i32_11 = arith.constant 0 : i32
    %48 = arith.cmpi ne, %47, %c0_i32_11 : i32
    scf.if %48 {
      %c0_12 = arith.constant 0 : index
      %c0_13 = arith.constant 0 : index
      %49 = vector.load %arg10[%c0_12, %c0_13] : memref<8x1xf32, #tpu.memory_space<vmem>>, vector<8x1xf32>
      %cst_14 = arith.constant 0.001953125 : f32
      %50 = vector.broadcast %cst_14 : f32 to vector<8x1xf32>
      %51 = arith.mulf %49, %50 : vector<8x1xf32>
      %c0_15 = arith.constant 0 : index
      %c0_16 = arith.constant 0 : index
      %52 = vector.load %arg11[%c0_15, %c0_16] : memref<8x1xf32, #tpu.memory_space<vmem>>, vector<8x1xf32>
      %cst_17 = arith.constant 0.001953125 : f32
      %53 = vector.broadcast %cst_17 : f32 to vector<8x1xf32>
      %54 = arith.mulf %52, %53 : vector<8x1xf32>
      %55 = arith.mulf %51, %51 : vector<8x1xf32>
      %56 = arith.subf %54, %55 : vector<8x1xf32>
      %cst_18 = arith.constant 0.000000e+00 : f32
      %57 = vector.broadcast %cst_18 : f32 to vector<8x1xf32>
      %58 = arith.maximumf %56, %57 : vector<8x1xf32>
      %c0_19 = arith.constant 0 : index
      %c0_20 = arith.constant 0 : index
      %59 = vector.load %arg7[%c0_19, %c0_20] : memref<8x1xf32, #tpu.memory_space<vmem>>, vector<8x1xf32>
      %cst_21 = arith.constant 9.99999974E-6 : f32
      %60 = vector.broadcast %cst_21 : f32 to vector<8x1xf32>
      %61 = arith.addf %58, %60 : vector<8x1xf32>
      %62 = math.rsqrt %61 : vector<8x1xf32>
      %63 = arith.mulf %59, %62 : vector<8x1xf32>
      %c0_22 = arith.constant 0 : index
      %c0_23 = arith.constant 0 : index
      %64 = vector.load %arg8[%c0_22, %c0_23] : memref<8x1xf32, #tpu.memory_space<vmem>>, vector<8x1xf32>
      %65 = arith.mulf %51, %63 : vector<8x1xf32>
      %66 = arith.subf %64, %65 : vector<8x1xf32>
      %67 = vector.broadcast %63 : vector<8x1xf32> to vector<8x512xf32>
      %68 = arith.mulf %37, %67 : vector<8x512xf32>
      %69 = vector.broadcast %66 : vector<8x1xf32> to vector<8x512xf32>
      %70 = arith.addf %68, %69 : vector<8x512xf32>
      %cst_24 = arith.constant 0.000000e+00 : f32
      %71 = vector.broadcast %cst_24 : f32 to vector<8x512xf32>
      %72 = arith.maximumf %70, %71 : vector<8x512xf32>
      %c0_25 = arith.constant 0 : index
      %c0_26 = arith.constant 0 : index
      %c0_27 = arith.constant 0 : index
      %73 = vector.load %arg9[%c0_25, %c0_26, %c0_27] : memref<1x8x512xf32, #tpu.memory_space<vmem>>, vector<1x8x512xf32>
      %74 = vector.shape_cast %73 : vector<1x8x512xf32> to vector<8x512xf32>
      %75 = vector.shape_cast %72 : vector<8x512xf32> to vector<1x8x512xf32>
      tpu.vector_store %arg9[%c0_25, %c0_26, %c0_27], %75 {strides = array<i32>} : memref<1x8x512xf32, #tpu.memory_space<vmem>>, vector<1x8x512xf32>,
    } else {
    }
    return
  }
  func.func @transform_0(%arg0: i32, %arg1: i32, %arg2: i32) -> (i32, i32) {
    %c0_i32 = arith.constant 0 : i32
    %c0_i32_0 = arith.constant 0 : i32
    return %c0_i32, %arg2 : i32, i32
  }
  func.func @transform_1(%arg0: i32, %arg1: i32, %arg2: i32) -> (i32, i32, i32) {
    %c0_i32 = arith.constant 0 : i32
    %c0_i32_0 = arith.constant 0 : i32
    return %arg0, %c0_i32, %arg2 : i32, i32, i32
  }
  func.func @transform_2(%arg0: i32, %arg1: i32, %arg2: i32) -> (i32, i32, i32) {
    %c1_i32 = arith.constant 1 : i32
    %0 = arith.addi %arg2, %c1_i32 : i32
    %c0_i32 = arith.constant 0 : i32
    %c0_i32_0 = arith.constant 0 : i32
    return %arg0, %c0_i32, %0 : i32, i32, i32
  }
  func.func @transform_3(%arg0: i32, %arg1: i32, %arg2: i32) -> (i32, i32) {
    %c0_i32 = arith.constant 0 : i32
    %c0_i32_0 = arith.constant 0 : i32
    %c0_i32_1 = arith.constant 0 : i32
    return %c0_i32, %c0_i32_0 : i32, i32
  }
  func.func @transform_4(%arg0: i32, %arg1: i32, %arg2: i32) -> (i32, i32) {
    %c0_i32 = arith.constant 0 : i32
    %c0_i32_0 = arith.constant 0 : i32
    %c0_i32_1 = arith.constant 0 : i32
    return %c0_i32, %c0_i32_0 : i32, i32
  }
  func.func @transform_5(%arg0: i32, %arg1: i32, %arg2: i32) -> (i32, i32) {
    %c0_i32 = arith.constant 0 : i32
    %c0_i32_0 = arith.constant 0 : i32
    %c0_i32_1 = arith.constant 0 : i32
    return %c0_i32, %c0_i32_0 : i32, i32
  }
  func.func @transform_6(%arg0: i32, %arg1: i32, %arg2: i32) -> (i32, i32, i32) {
    %0 = arith.muli %arg2, %arg1 : i32
    %c0_i32 = arith.constant 0 : i32
    %c0_i32_0 = arith.constant 0 : i32
    return %arg0, %c0_i32, %0 : i32, i32, i32
  }
}

</mosaic_0001>

<llo_original>
// kernel: tpu_custom_call.1
$region0: #{tpu_custom_call.1}
  #allocation0 [shape = 'u32[]', space=smem, size = 0x4, offset = 0x4, fixed_abs, tag = 'smem constant byte address 0x4 - core index']
  #allocation1 [shape = 'u32[72,128]{1,0:T(1,128)}', space=vmem, size = 0x9000, scoped, tag = 'internal scratch']
  #allocation2 [shape = 'f32[8,1]{1,0:T(8,128)}', space=vmem, size = 0x1000, scoped, tag = 'scratch operand']
  #allocation3 [shape = 'f32[8,1]{1,0:T(8,128)}', space=vmem, size = 0x1000, scoped, tag = 'scratch operand']
  %s0 = inlined_call_operand.hbm [shape: f32[1,1024], index: 0, kind: input, shape index: {}]
  %s1 = inlined_call_operand.hbm [shape: f32[2,8,1536], index: 1, kind: input, shape index: {}]
  %s2 = inlined_call_operand.hbm [shape: f32[2,8,1536], index: 2, kind: input, shape index: {}]
  %s3 = inlined_call_operand.vmem [shape: f32[8,216], index: 3, kind: input, shape index: {}]
  %s4 = inlined_call_operand.vmem [shape: f32[8,1], index: 4, kind: input, shape index: {}]
  %s5 = inlined_call_operand.vmem [shape: f32[8,1], index: 5, kind: input, shape index: {}]
  %s6 = inlined_call_operand.hbm [shape: f32[2,8,1024], index: 6, kind: output, shape index: {}]
  %s7 = sld [smem:[#allocation0]]
  $region81: #{tpu_custom_call.1} parent=0
    _
  %s9 = ssub.s32 1, %s7
  %s10 = scalar_select 0, %s9, %s7
  $region1: #{tpu_custom_call.1} parent=0
    #allocation4 [shape = 'u8[4096]{0}', space=vmem, size = 0x1000, scoped, tag = 'input window, operand 0']
    #allocation5 [shape = 's32[2]{0}', space=sflag, size = 0x8, scoped, tag = 'scoped memory for tpu_custom_call.1']
    #allocation6 [shape = 's32[2]{0}', space=sflag, size = 0x8, scoped, tag = 'scoped memory for tpu_custom_call.1']
    #allocation7 [shape = 'u8[32768]{0}', space=vmem, size = 0x8000, scoped, tag = 'input window, operand 1']
    #allocation8 [shape = 's32[2]{0}', space=sflag, size = 0x8, scoped, tag = 'scoped memory for tpu_custom_call.1']
    #allocation9 [shape = 'u8[32768]{0}', space=vmem, size = 0x8000, scoped, tag = 'input window, operand 2']
    #allocation10 [shape = 'u8[32768]{0}', space=vmem, size = 0x8000, scoped, tag = 'output window, operand 0']
    %11 = vsyncpa [#allocation5], 0
    %s12 = scalar_lea.sflag [#allocation5], 1
    %13 = vsyncpa %s12, 0
    %14 = vsyncpa [#allocation8], 0
    %s15 = scalar_lea.sflag [#allocation8], 1
    %16 = vsyncpa %s15, 0
    %17 = vsyncpa [#allocation6], 0
    %s18 = scalar_lea.sflag [#allocation6], 1
    %19 = vsyncpa %s18, 0
    loop: start=0, step=1, limit=10
    $region2: #{tpu_custom_call.1} parent=1 // loop_pre_header
      _
    $region3: #{tpu_custom_call.1} parent=1 // loop_header
      %s21 = sphi 0, %s25
      %p22 = scmp.ge.s32.totalorder %s21, 10
      %s28 = sphi 0, %s47
      %s29 = sphi 0, %s43
      %s30 = sphi 0, %s39
      %s31 = sphi 0, %s28
      %s32 = sphi 0, %s29
      %s33 = sphi 0, %s30
      %s34 = sphi 0, %s31
      %s35 = sphi 0, %s32
      %s36 = sphi 0, %s33
      %s50 = sphi 0, %s52
      %s53 = sphi 0, %s50
      %s54 = sphi 0, %s53
      %s70 = sphi 0, %s54
      %s78 = sphi 0, %s80
      %s81 = sphi 0, %s78
      %s82 = sphi 0, %s81
      %s98 = sphi 0, %s82
      %s108 = sphi 0, %s110
      %s111 = sphi 0, %s108
      %s112 = sphi 0, %s111
      %s128 = sphi 0, %s112
      %s132 = sphi 0, %s132
      %s134 = sphi 0, %s132
      %s135 = sphi 0, %s134
      %s149 = sphi 0, %s135
      %s153 = sphi 0, %s153
      %s155 = sphi 0, %s153
      %s156 = sphi 0, %s155
      %s170 = sphi 0, %s156
      %s174 = sphi 0, %s174
      %s176 = sphi 0, %s174
      %s177 = sphi 0, %s176
      %s191 = sphi 0, %s177
      %s201 = sphi 0, %s203
      %s204 = sphi 0, %s201
      %s205 = sphi 0, %s204
      %s221 = sphi 0, %s205
    $region4: #{tpu_custom_call.1} parent=1 // loop_header_branch
      %24 = sbr.rel (%p22) target = $region8
    $region5: #{tpu_custom_call.1} parent=1 // loop_body
      %s26 = ssub.s32 %s21, 1
      %s27 = ssub.s32 %s21, 2
      %s37 = sadd.s32 1, %s30
      %p38 = scmp.ge.s32.totalorder %s37, 2
      %s39 = scalar_select %p38, 0, %s37
      %s40 = sadd.s32 1, %s29
      %s41 = scalar_select %p38, %s40, %s29
      %p42 = scmp.ge.s32.totalorder %s41, 2
      %s43 = scalar_select %p42, 0, %s41
      %s44 = sadd.s32 1, %s28
      %s45 = scalar_select %p42, %s44, %s28
      %p46 = scmp.ge.s32.totalorder %s45, 2
      %s47 = scalar_select %p46, 0, %s45
      %s48 = ssub.s32 %s30, %s39
      %p49 = scmp.eq.s32.totalorder %s48, 0
      %s51 = sadd.s32 %s50, 1
      %s52 = scalar_select %p49, %s50, %s51
      %p55 = pneg %p49
      %p56 = scmp.eq.s32.totalorder %s21, 7
      %p57 = por %p55, %p56
      %p58 = scmp.ne.s32.totalorder %s50, %s53
      %p59 = scmp.eq.s32.totalorder %s21, 0
      %p60 = por %p58, %p59
      %p61 = scmp.ne.s32.totalorder %s50, %s53
      %p62 = scmp.eq.s32.totalorder %s26, 7
      %p63 = por %p61, %p62
      %p64 = scmp.ne.s32.totalorder %s53, %s54
      %p65 = scmp.eq.s32.totalorder %s26, 0
      %p66 = por %p64, %p65
      %p67 = scmp.ne.s32.totalorder %s53, %s54
      %p68 = scmp.eq.s32.totalorder %s27, 7
      %p69 = por %p67, %p68
      %p71 = scmp.ne.s32.totalorder %s54, %s70
      %p72 = scmp.eq.s32.totalorder %s27, 0
      %p73 = por %p71, %p72
      %s74 = ssub.s32 %s28, %s47
      %s75 = ssub.s32 %s30, %s39
      %s76 = sor.u32 %s74, %s75
      %p77 = scmp.eq.s32.totalorder %s76, 0
      %s79 = sadd.s32 %s78, 1
      %s80 = scalar_select %p77, %s78, %s79
      %p83 = pneg %p77
      %p84 = scmp.eq.s32.totalorder %s21, 7
      %p85 = por %p83, %p84
      %p86 = scmp.ne.s32.totalorder %s78, %s81
      %p87 = scmp.eq.s32.totalorder %s21, 0
      %p88 = por %p86, %p87
      %p89 = scmp.ne.s32.totalorder %s78, %s81
      %p90 = scmp.eq.s32.totalorder %s26, 7
      %p91 = por %p89, %p90
      %p92 = scmp.ne.s32.totalorder %s81, %s82
      %p93 = scmp.eq.s32.totalorder %s26, 0
      %p94 = por %p92, %p93
      %p95 = scmp.ne.s32.totalorder %s81, %s82
      %p96 = scmp.eq.s32.totalorder %s27, 7
      %p97 = por %p95, %p96
      %p99 = scmp.ne.s32.totalorder %s82, %s98
      %p100 = scmp.eq.s32.totalorder %s27, 0
      %p101 = por %p99, %p100
      %s102 = sadd.s32 %s30, 1
      %s103 = sadd.s32 %s39, 1
      %s104 = ssub.s32 %s28, %s47
      %s105 = ssub.s32 %s102, %s103
      %s106 = sor.u32 %s104, %s105
      %p107 = scmp.eq.s32.totalorder %s106, 0
      %s109 = sadd.s32 %s108, 1
      %s110 = scalar_select %p107, %s108, %s109
      %p113 = pneg %p107
      %p114 = scmp.eq.s32.totalorder %s21, 7
      %p115 = por %p113, %p114
      %p116 = scmp.ne.s32.totalorder %s108, %s111
      %p117 = scmp.eq.s32.totalorder %s21, 0
      %p118 = por %p116, %p117
      %p119 = scmp.ne.s32.totalorder %s108, %s111
      %p120 = scmp.eq.s32.totalorder %s26, 7
      %p121 = por %p119, %p120
      %p122 = scmp.ne.s32.totalorder %s111, %s112
      %p123 = scmp.eq.s32.totalorder %s26, 0
      %p124 = por %p122, %p123
      %p125 = scmp.ne.s32.totalorder %s111, %s112
      %p126 = scmp.eq.s32.totalorder %s27, 7
      %p127 = por %p125, %p126
      %p129 = scmp.ne.s32.totalorder %s112, %s128
      %p130 = scmp.eq.s32.totalorder %s27, 0
      %p131 = por %p129, %p130
      %s133 = sadd.s32 %s132, 1
      %p136 = scmp.eq.s32.totalorder %s21, 7
      %p137 = scmp.ne.s32.totalorder %s132, %s134
      %p138 = scmp.eq.s32.totalorder %s21, 0
      %p139 = por %p137, %p138
      %p140 = scmp.ne.s32.totalorder %s132, %s134
      %p141 = scmp.eq.s32.totalorder %s26, 7
      %p142 = por %p140, %p141
      %p143 = scmp.ne.s32.totalorder %s134, %s135
      %p144 = scmp.eq.s32.totalorder %s26, 0
      %p145 = por %p143, %p144
      %p146 = scmp.ne.s32.totalorder %s134, %s135
      %p147 = scmp.eq.s32.totalorder %s27, 7
      %p148 = por %p146, %p147
      %p150 = scmp.ne.s32.totalorder %s135, %s149
      %p151 = scmp.eq.s32.totalorder %s27, 0
      %p152 = por %p150, %p151
      %s154 = sadd.s32 %s153, 1
      %p157 = scmp.eq.s32.totalorder %s21, 7
      %p158 = scmp.ne.s32.totalorder %s153, %s155
      %p159 = scmp.eq.s32.totalorder %s21, 0
      %p160 = por %p158, %p159
      %p161 = scmp.ne.s32.totalorder %s153, %s155
      %p162 = scmp.eq.s32.totalorder %s26, 7
      %p163 = por %p161, %p162
      %p164 = scmp.ne.s32.totalorder %s155, %s156
      %p165 = scmp.eq.s32.totalorder %s26, 0
      %p166 = por %p164, %p165
      %p167 = scmp.ne.s32.totalorder %s155, %s156
      %p168 = scmp.eq.s32.totalorder %s27, 7
      %p169 = por %p167, %p168
      %p171 = scmp.ne.s32.totalorder %s156, %s170
      %p172 = scmp.eq.s32.totalorder %s27, 0
      %p173 = por %p171, %p172
      %s175 = sadd.s32 %s174, 1
      %p178 = scmp.eq.s32.totalorder %s21, 7
      %p179 = scmp.ne.s32.totalorder %s174, %s176
      %p180 = scmp.eq.s32.totalorder %s21, 0
      %p181 = por %p179, %p180
      %p182 = scmp.ne.s32.totalorder %s174, %s176
      %p183 = scmp.eq.s32.totalorder %s26, 7
      %p184 = por %p182, %p183
      %p185 = scmp.ne.s32.totalorder %s176, %s177
      %p186 = scmp.eq.s32.totalorder %s26, 0
      %p187 = por %p185, %p186
      %p188 = scmp.ne.s32.totalorder %s176, %s177
      %p189 = scmp.eq.s32.totalorder %s27, 7
      %p190 = por %p188, %p189
      %p192 = scmp.ne.s32.totalorder %s177, %s191
      %p193 = scmp.eq.s32.totalorder %s27, 0
      %p194 = por %p192, %p193
      %s195 = smul.u32 %s30, %s29
      %s196 = smul.u32 %s39, %s43
      %s197 = ssub.s32 %s28, %s47
      %s198 = ssub.s32 %s195, %s196
      %s199 = sor.u32 %s197, %s198
      %p200 = scmp.eq.s32.totalorder %s199, 0
      %s202 = sadd.s32 %s201, 1
      %s203 = scalar_select %p200, %s201, %s202
      %p206 = pneg %p200
      %p207 = scmp.eq.s32.totalorder %s21, 7
      %p208 = por %p206, %p207
      %p209 = scmp.ne.s32.totalorder %s201, %s204
      %p210 = scmp.eq.s32.totalorder %s21, 0
      %p211 = por %p209, %p210
      %p212 = scmp.ne.s32.totalorder %s201, %s204
      %p213 = scmp.eq.s32.totalorder %s26, 7
      %p214 = por %p212, %p213
      %p215 = scmp.ne.s32.totalorder %s204, %s205
      %p216 = scmp.eq.s32.totalorder %s26, 0
      %p217 = por %p215, %p216
      %p218 = scmp.ne.s32.totalorder %s204, %s205
      %p219 = scmp.eq.s32.totalorder %s27, 7
      %p220 = por %p218, %p219
      %p222 = scmp.ne.s32.totalorder %s205, %s221
      %p223 = scmp.eq.s32.totalorder %s27, 0
      %p224 = por %p222, %p223
      %p225 = scmp.le.s32.totalorder 1, %s21
      %p226 = scmp.lt.s32.totalorder %s21, 9
      %p227 = pnand %p225, %p226
      %p228 = pneg %p227
      // Predicated region
      $region9: #{tpu_custom_call.1} parent=5 // pred_check
        _
      $region10: #{tpu_custom_call.1} parent=5 // pred_check_branch
        %230 = sbr.rel (%p227) target = $region12
      $region11: #{tpu_custom_call.1} parent=5 // pred_region
        %s231 = ssub.s32 %s21, 1
        // Predicated region
        $region13: #{tpu_custom_call.1} parent=11 // pred_check
          %p232 = pneg %p145
        $region14: #{tpu_custom_call.1} parent=11 // pred_check_branch
          %234 = sbr.rel (%p232) target = $region16
        $region15: #{tpu_custom_call.1} parent=11 // pred_region
          _
        $region16: #{tpu_custom_call.1} parent=11 // pred_fallthru
          _
        // Predicated region
        $region17: #{tpu_custom_call.1} parent=11 // pred_check
          %p235 = pneg %p166
        $region18: #{tpu_custom_call.1} parent=11 // pred_check_branch
          %237 = sbr.rel (%p235) target = $region20
        $region19: #{tpu_custom_call.1} parent=11 // pred_region
          _
        $region20: #{tpu_custom_call.1} parent=11 // pred_fallthru
          _
        // Predicated region
        $region21: #{tpu_custom_call.1} parent=11 // pred_check
          %p238 = pneg %p187
        $region22: #{tpu_custom_call.1} parent=11 // pred_check_branch
          %240 = sbr.rel (%p238) target = $region24
        $region23: #{tpu_custom_call.1} parent=11 // pred_region
          _
        $region24: #{tpu_custom_call.1} parent=11 // pred_fallthru
          _
      $region12: #{tpu_custom_call.1} parent=5 // pred_fallthru
        _
      %p241 = scmp.lt.s32.totalorder %s21, 8
      // Predicated region
      $region25: #{tpu_custom_call.1} parent=5 // pred_check
        %p242 = pneg %p241
      $region26: #{tpu_custom_call.1} parent=5 // pred_check_branch
        %244 = sbr.rel (%p242) target = $region28
      $region27: #{tpu_custom_call.1} parent=5 // pred_region
        // Predicated region
        $region29: #{tpu_custom_call.1} parent=27 // pred_check
          %p245 = pneg %p60
        $region30: #{tpu_custom_call.1} parent=27 // pred_check_branch
          %247 = sbr.rel (%p245) target = $region32
        $region31: #{tpu_custom_call.1} parent=27 // pred_region
          %s248 = sand.u32 %s50, 1
          %s249 = scalar_lea.sflag [#allocation5], %s248
          %s250 = sand.u32 %s50, 1
          %s251 = smul.addr %s250, 4
          %s252 = scalar_lea.vmem [#allocation4], %s251
          %s253 = smul.u32 4, %s30
          %255 = vsyncadd %s249, 0
          %s256 = scalar_lea.hbm %s0, %s253
          %s258 = sshll.u32 %s256, 4
          %s259 = int_to_ptr.hbm [resolvable:$true] %s258
          %s260 = sshll.u32 %s252, 4
          %s261 = int_to_ptr.vmem [resolvable:$true] %s260
          %263 = dma.hbm_to_vmem [thread:$0]  %s259, 64, %s261, %s249
        $region32: #{tpu_custom_call.1} parent=27 // pred_fallthru
          _
        // Predicated region
        $region33: #{tpu_custom_call.1} parent=27 // pred_check
          %p264 = pneg %p88
        $region34: #{tpu_custom_call.1} parent=27 // pred_check_branch
          %266 = sbr.rel (%p264) target = $region36
        $region35: #{tpu_custom_call.1} parent=27 // pred_region
          %s267 = sand.u32 %s21, 1
          %s268 = scalar_lea.sflag [#allocation8], %s267
          %s269 = sand.u32 %s78, 1
          %s270 = smul.addr %s269, 32
          %s271 = scalar_lea.vmem [#allocation7], %s270
          %s272 = smul.u32 4, %s30
          %274 = vsyncadd %s268, 0
          %s275 = smul.addr %s28, 12
          %s276 = sadd.s32 %s272, %s275
          %s277 = smul.addr %s276, 8
          %s278 = scalar_lea.hbm %s1, %s277
          %s280 = sshll.u32 %s278, 4
          %s281 = int_to_ptr.hbm [resolvable:$true] %s280
          %s282 = sshll.u32 %s271, 4
          %s283 = int_to_ptr.vmem [resolvable:$true] %s282
          %285 = dma.hbm_to_vmem [thread:$0]  %s281, 512, %s283, %s268
        $region36: #{tpu_custom_call.1} parent=27 // pred_fallthru
          _
        // Predicated region
        $region37: #{tpu_custom_call.1} parent=27 // pred_check
          %p286 = pneg %p118
        $region38: #{tpu_custom_call.1} parent=27 // pred_check_branch
          %288 = sbr.rel (%p286) target = $region40
        $region39: #{tpu_custom_call.1} parent=27 // pred_region
          %s289 = sand.u32 %s21, 1
          %s290 = scalar_lea.sflag [#allocation8], %s289
          %s291 = sand.u32 %s108, 1
          %s292 = smul.addr %s291, 32
          %s293 = scalar_lea.vmem [#allocation9], %s292
          %s294 = sadd.s32 %s30, 1
          %s295 = smul.u32 4, %s294
          %297 = vsyncadd %s290, 0
          %s298 = smul.addr %s28, 12
          %s299 = sadd.s32 %s295, %s298
          %s300 = smul.addr %s299, 8
          %s301 = scalar_lea.hbm %s2, %s300
          %s303 = sshll.u32 %s301, 4
          %s304 = int_to_ptr.hbm [resolvable:$true] %s303
          %s305 = sshll.u32 %s293, 4
          %s306 = int_to_ptr.vmem [resolvable:$true] %s305
          %308 = dma.hbm_to_vmem [thread:$0]  %s304, 512, %s306, %s290
        $region40: #{tpu_custom_call.1} parent=27 // pred_fallthru
          _
      $region28: #{tpu_custom_call.1} parent=5 // pred_fallthru
        _
      %p309 = scmp.le.s32.totalorder 1, %s21
      %p310 = scmp.lt.s32.totalorder %s21, 9
      %p311 = pnand %p309, %p310
      %p312 = pneg %p311
      // Predicated region
      $region41: #{tpu_custom_call.1} parent=5 // pred_check
        _
      $region42: #{tpu_custom_call.1} parent=5 // pred_check_branch
        %314 = sbr.rel (%p311) target = $region44
      $region43: #{tpu_custom_call.1} parent=5 // pred_region
        %s315 = ssub.s32 %s21, 1
        %s316 = sand.u32 %s53, 1
        %s317 = scalar_lea.sflag [#allocation5], %s316
        %s318 = sand.u32 %s53, 1
        %s319 = smul.addr %s318, 4
        %s320 = scalar_lea.vmem [#allocation4], %s319
        // Predicated region
        $region45: #{tpu_custom_call.1} parent=43 // pred_check
          %p321 = pneg %p66
        $region46: #{tpu_custom_call.1} parent=43 // pred_check_branch
          %323 = sbr.rel (%p321) target = $region48
        $region47: #{tpu_custom_call.1} parent=43 // pred_region
          %325 = dma.done %s317, 64
        $region48: #{tpu_custom_call.1} parent=43 // pred_fallthru
          _
        %s326 = sand.u32 %s26, 1
        %s327 = scalar_lea.sflag [#allocation8], %s326
        %s328 = sand.u32 %s81, 1
        %s329 = smul.addr %s328, 32
        %s330 = scalar_lea.vmem [#allocation7], %s329
        // Predicated region
        $region49: #{tpu_custom_call.1} parent=43 // pred_check
          %p331 = pneg %p94
        $region50: #{tpu_custom_call.1} parent=43 // pred_check_branch
          %333 = sbr.rel (%p331) target = $region52
        $region51: #{tpu_custom_call.1} parent=43 // pred_region
          %335 = dma.done %s327, 512
        $region52: #{tpu_custom_call.1} parent=43 // pred_fallthru
          _
        %s336 = sand.u32 %s26, 1
        %s337 = scalar_lea.sflag [#allocation8], %s336
        %s338 = sand.u32 %s111, 1
        %s339 = smul.addr %s338, 32
        %s340 = scalar_lea.vmem [#allocation9], %s339
        // Predicated region
        $region53: #{tpu_custom_call.1} parent=43 // pred_check
          %p341 = pneg %p124
        $region54: #{tpu_custom_call.1} parent=43 // pred_check_branch
          %343 = sbr.rel (%p341) target = $region56
        $region55: #{tpu_custom_call.1} parent=43 // pred_region
          %345 = dma.done %s337, 512
        $region56: #{tpu_custom_call.1} parent=43 // pred_fallthru
          _
        %s346 = sand.u32 %s53, 1
        %s347 = scalar_lea.sflag [#allocation5], %s346
        %s348 = sand.u32 %s53, 1
        %s349 = smul.addr %s348, 4
        %s350 = scalar_lea.vmem [#allocation4], %s349
        %p351 = pneg %p66
        %p352 = pneg %p63
        %s353 = sand.u32 %s26, 1
        %s354 = scalar_lea.sflag [#allocation8], %s353
        %s355 = sand.u32 %s81, 1
        %s356 = smul.addr %s355, 32
        %s357 = scalar_lea.vmem [#allocation7], %s356
        %p358 = pneg %p94
        %p359 = pneg %p91
        %s360 = sand.u32 %s26, 1
        %s361 = scalar_lea.sflag [#allocation8], %s360
        %s362 = sand.u32 %s111, 1
        %s363 = smul.addr %s362, 32
        %s364 = scalar_lea.vmem [#allocation9], %s363
        %p365 = pneg %p124
        %p366 = pneg %p121
        %p367 = pneg %p145
        %p368 = pneg %p142
        %p369 = pneg %p166
        %p370 = pneg %p163
        %p371 = pneg %p187
        %p372 = pneg %p184
        %p373 = pneg %p217
        %p374 = pneg %p214
        %s375 = sand.u32 %s204, 1
        %s376 = scalar_lea.sflag [#allocation6], %s375
        %s377 = sand.u32 %s204, 1
        %s378 = smul.addr %s377, 32
        %s379 = scalar_lea.vmem [#allocation10], %s378
        %s380 = smul.u32 4, %s33
        %s381 = smul.u32 4, %s33
        %s382 = sadd.s32 %s33, 1
        %s383 = smul.u32 4, %s382
        %s384 = smul.u32 %s33, %s32
        %s385 = smul.u32 4, %s384
        %v386 = vld [vmem:[%s330] sm:$0xff]
        %v387 = vld [vmem:[%s330 + $0x8] sm:$0xff]
        %v388 = vld [vmem:[%s330 + $0x10] sm:$0xff]
        %v389 = vld [vmem:[%s330 + $0x18] sm:$0xff]
        %v390 = vld [vmem:[%s340] sm:$0xff]
        %v391 = vld [vmem:[%s340 + $0x8] sm:$0xff]
        %397 = vrot.lane.b32.xlu0 %v386, 127
        %v398 = vpop.permute.xlu0 %397
        %399 = vrot.lane.b32.xlu0 %v387, 127
        %v400 = vpop.permute.xlu0 %399
        %401 = vrot.lane.b32.xlu0 %v388, 127
        %v402 = vpop.permute.xlu0 %401
        %403 = vrot.lane.b32.xlu0 %v389, 127
        %v404 = vpop.permute.xlu0 %403
        %405 = vrot.lane.b32.xlu0 %v390, 127
        %v406 = vpop.permute.xlu0 %405
        %vm407 = vcmask 1039360
        %v408 = vsel %vm407, %v398, %v400
        %v409 = vsel %vm407, %v400, %v402
        %v410 = vsel %vm407, %v402, %v404
        %v411 = vsel %vm407, %v404, %v406
        %416 = vrot.lane.b32.xlu0 %v386, 126
        %v417 = vpop.permute.xlu0 %416
        %418 = vrot.lane.b32.xlu0 %v387, 126
        %v419 = vpop.permute.xlu0 %418
        %420 = vrot.lane.b32.xlu0 %v388, 126
        %v421 = vpop.permute.xlu0 %420
        %422 = vrot.lane.b32.xlu0 %v389, 126
        %v423 = vpop.permute.xlu0 %422
        %424 = vrot.lane.b32.xlu0 %v390, 126
        %v425 = vpop.permute.xlu0 %424
        %vm426 = vcmask 1031168
        %v427 = vsel %vm426, %v417, %v419
        %v428 = vsel %vm426, %v419, %v421
        %v429 = vsel %vm426, %v421, %v423
        %v430 = vsel %vm426, %v423, %v425
        %435 = vrot.lane.b32.xlu0 %v386, 118
        %v436 = vpop.permute.xlu0 %435
        %437 = vrot.lane.b32.xlu0 %v387, 118
        %v438 = vpop.permute.xlu0 %437
        %439 = vrot.lane.b32.xlu0 %v388, 118
        %v440 = vpop.permute.xlu0 %439
        %441 = vrot.lane.b32.xlu0 %v389, 118
        %v442 = vpop.permute.xlu0 %441
        %443 = vrot.lane.b32.xlu0 %v390, 118
        %v444 = vpop.permute.xlu0 %443
        %vm445 = vcmask 965632
        %v446 = vsel %vm445, %v436, %v438
        %v447 = vsel %vm445, %v438, %v440
        %v448 = vsel %vm445, %v440, %v442
        %v449 = vsel %vm445, %v442, %v444
        %454 = vrot.lane.b32.xlu0 %v386, 117
        %v455 = vpop.permute.xlu0 %454
        %456 = vrot.lane.b32.xlu0 %v387, 117
        %v457 = vpop.permute.xlu0 %456
        %458 = vrot.lane.b32.xlu0 %v388, 117
        %v459 = vpop.permute.xlu0 %458
        %460 = vrot.lane.b32.xlu0 %v389, 117
        %v461 = vpop.permute.xlu0 %460
        %462 = vrot.lane.b32.xlu0 %v390, 117
        %v463 = vpop.permute.xlu0 %462
        %vm464 = vcmask 957440
        %v465 = vsel %vm464, %v455, %v457
        %v466 = vsel %vm464, %v457, %v459
        %v467 = vsel %vm464, %v459, %v461
        %v468 = vsel %vm464, %v461, %v463
        %473 = vrot.lane.b32.xlu0 %v386, 116
        %v474 = vpop.permute.xlu0 %473
        %475 = vrot.lane.b32.xlu0 %v387, 116
        %v476 = vpop.permute.xlu0 %475
        %477 = vrot.lane.b32.xlu0 %v388, 116
        %v478 = vpop.permute.xlu0 %477
        %479 = vrot.lane.b32.xlu0 %v389, 116
        %v480 = vpop.permute.xlu0 %479
        %481 = vrot.lane.b32.xlu0 %v390, 116
        %v482 = vpop.permute.xlu0 %481
        %vm483 = vcmask 949248
        %v484 = vsel %vm483, %v474, %v476
        %v485 = vsel %vm483, %v476, %v478
        %v486 = vsel %vm483, %v478, %v480
        %v487 = vsel %vm483, %v480, %v482
        %492 = vrot.lane.b32.xlu0 %v386, 108
        %v493 = vpop.permute.xlu0 %492
        %494 = vrot.lane.b32.xlu0 %v387, 108
        %v495 = vpop.permute.xlu0 %494
        %496 = vrot.lane.b32.xlu0 %v388, 108
        %v497 = vpop.permute.xlu0 %496
        %498 = vrot.lane.b32.xlu0 %v389, 108
        %v499 = vpop.permute.xlu0 %498
        %500 = vrot.lane.b32.xlu0 %v390, 108
        %v501 = vpop.permute.xlu0 %500
        %vm502 = vcmask 883712
        %v503 = vsel %vm502, %v493, %v495
        %v504 = vsel %vm502, %v495, %v497
        %v505 = vsel %vm502, %v497, %v499
        %v506 = vsel %vm502, %v499, %v501
        %511 = vrot.lane.b32.xlu0 %v386, 107
        %v512 = vpop.permute.xlu0 %511
        %513 = vrot.lane.b32.xlu0 %v387, 107
        %v514 = vpop.permute.xlu0 %513
        %515 = vrot.lane.b32.xlu0 %v388, 107
        %v516 = vpop.permute.xlu0 %515
        %517 = vrot.lane.b32.xlu0 %v389, 107
        %v518 = vpop.permute.xlu0 %517
        %519 = vrot.lane.b32.xlu0 %v390, 107
        %v520 = vpop.permute.xlu0 %519
        %vm521 = vcmask 875520
        %v522 = vsel %vm521, %v512, %v514
        %v523 = vsel %vm521, %v514, %v516
        %v524 = vsel %vm521, %v516, %v518
        %v525 = vsel %vm521, %v518, %v520
        %530 = vrot.lane.b32.xlu0 %v386, 106
        %v531 = vpop.permute.xlu0 %530
        %532 = vrot.lane.b32.xlu0 %v387, 106
        %v533 = vpop.permute.xlu0 %532
        %534 = vrot.lane.b32.xlu0 %v388, 106
        %v535 = vpop.permute.xlu0 %534
        %536 = vrot.lane.b32.xlu0 %v389, 106
        %v537 = vpop.permute.xlu0 %536
        %538 = vrot.lane.b32.xlu0 %v390, 106
        %v539 = vpop.permute.xlu0 %538
        %vm540 = vcmask 867328
        %v541 = vsel %vm540, %v531, %v533
        %v542 = vsel %vm540, %v533, %v535
        %v543 = vsel %vm540, %v535, %v537
        %v544 = vsel %vm540, %v537, %v539
        %549 = vrot.lane.b32.xlu0 %v386, 28
        %v550 = vpop.permute.xlu0 %549
        %551 = vrot.lane.b32.xlu0 %v387, 28
        %v552 = vpop.permute.xlu0 %551
        %553 = vrot.lane.b32.xlu0 %v388, 28
        %v554 = vpop.permute.xlu0 %553
        %555 = vrot.lane.b32.xlu0 %v389, 28
        %v556 = vpop.permute.xlu0 %555
        %557 = vrot.lane.b32.xlu0 %v390, 28
        %v558 = vpop.permute.xlu0 %557
        %vm559 = vcmask 228352
        %v560 = vsel %vm559, %v550, %v552
        %v561 = vsel %vm559, %v552, %v554
        %v562 = vsel %vm559, %v554, %v556
        %v563 = vsel %vm559, %v556, %v558
        %568 = vrot.lane.b32.xlu0 %v386, 27
        %v569 = vpop.permute.xlu0 %568
        %570 = vrot.lane.b32.xlu0 %v387, 27
        %v571 = vpop.permute.xlu0 %570
        %572 = vrot.lane.b32.xlu0 %v388, 27
        %v573 = vpop.permute.xlu0 %572
        %574 = vrot.lane.b32.xlu0 %v389, 27
        %v575 = vpop.permute.xlu0 %574
        %576 = vrot.lane.b32.xlu0 %v390, 27
        %v577 = vpop.permute.xlu0 %576
        %vm578 = vcmask 220160
        %v579 = vsel %vm578, %v569, %v571
        %v580 = vsel %vm578, %v571, %v573
        %v581 = vsel %vm578, %v573, %v575
        %v582 = vsel %vm578, %v575, %v577
        %587 = vrot.lane.b32.xlu0 %v386, 26
        %v588 = vpop.permute.xlu0 %587
        %589 = vrot.lane.b32.xlu0 %v387, 26
        %v590 = vpop.permute.xlu0 %589
        %591 = vrot.lane.b32.xlu0 %v388, 26
        %v592 = vpop.permute.xlu0 %591
        %593 = vrot.lane.b32.xlu0 %v389, 26
        %v594 = vpop.permute.xlu0 %593
        %595 = vrot.lane.b32.xlu0 %v390, 26
        %v596 = vpop.permute.xlu0 %595
        %vm597 = vcmask 211968
        %v598 = vsel %vm597, %v588, %v590
        %v599 = vsel %vm597, %v590, %v592
        %v600 = vsel %vm597, %v592, %v594
        %v601 = vsel %vm597, %v594, %v596
        %606 = vrot.lane.b32.xlu0 %v386, 18
        %v607 = vpop.permute.xlu0 %606
        %608 = vrot.lane.b32.xlu0 %v387, 18
        %v609 = vpop.permute.xlu0 %608
        %610 = vrot.lane.b32.xlu0 %v388, 18
        %v611 = vpop.permute.xlu0 %610
        %612 = vrot.lane.b32.xlu0 %v389, 18
        %v613 = vpop.permute.xlu0 %612
        %614 = vrot.lane.b32.xlu0 %v390, 18
        %v615 = vpop.permute.xlu0 %614
        %vm616 = vcmask 146432
        %v617 = vsel %vm616, %v607, %v609
        %v618 = vsel %vm616, %v609, %v611
        %v619 = vsel %vm616, %v611, %v613
        %v620 = vsel %vm616, %v613, %v615
        %625 = vrot.lane.b32.xlu0 %v386, 17
        %v626 = vpop.permute.xlu0 %625
        %627 = vrot.lane.b32.xlu0 %v387, 17
        %v628 = vpop.permute.xlu0 %627
        %629 = vrot.lane.b32.xlu0 %v388, 17
        %v630 = vpop.permute.xlu0 %629
        %631 = vrot.lane.b32.xlu0 %v389, 17
        %v632 = vpop.permute.xlu0 %631
        %633 = vrot.lane.b32.xlu0 %v390, 17
        %v634 = vpop.permute.xlu0 %633
        %vm635 = vcmask 138240
        %v636 = vsel %vm635, %v626, %v628
        %v637 = vsel %vm635, %v628, %v630
        %v638 = vsel %vm635, %v630, %v632
        %v639 = vsel %vm635, %v632, %v634
        %644 = vrot.lane.b32.xlu0 %v386, 16
        %v645 = vpop.permute.xlu0 %644
        %646 = vrot.lane.b32.xlu0 %v387, 16
        %v647 = vpop.permute.xlu0 %646
        %648 = vrot.lane.b32.xlu0 %v388, 16
        %v649 = vpop.permute.xlu0 %648
        %650 = vrot.lane.b32.xlu0 %v389, 16
        %v651 = vpop.permute.xlu0 %650
        %652 = vrot.lane.b32.xlu0 %v390, 16
        %v653 = vpop.permute.xlu0 %652
        %vm654 = vcmask 130048
        %v655 = vsel %vm654, %v645, %v647
        %v656 = vsel %vm654, %v647, %v649
        %v657 = vsel %vm654, %v649, %v651
        %v658 = vsel %vm654, %v651, %v653
        %663 = vrot.lane.b32.xlu0 %v386, 8
        %v664 = vpop.permute.xlu0 %663
        %665 = vrot.lane.b32.xlu0 %v387, 8
        %v666 = vpop.permute.xlu0 %665
        %667 = vrot.lane.b32.xlu0 %v388, 8
        %v668 = vpop.permute.xlu0 %667
        %669 = vrot.lane.b32.xlu0 %v389, 8
        %v670 = vpop.permute.xlu0 %669
        %671 = vrot.lane.b32.xlu0 %v390, 8
        %v672 = vpop.permute.xlu0 %671
        %vm673 = vcmask 64512
        %v674 = vsel %vm673, %v664, %v666
        %v675 = vsel %vm673, %v666, %v668
        %v676 = vsel %vm673, %v668, %v670
        %v677 = vsel %vm673, %v670, %v672
        %683 = vrot.lane.b32.xlu0 %v387, 49
        %v684 = vpop.permute.xlu0 %683
        %685 = vrot.lane.b32.xlu0 %v388, 49
        %v686 = vpop.permute.xlu0 %685
        %687 = vrot.lane.b32.xlu0 %v389, 49
        %v688 = vpop.permute.xlu0 %687
        %689 = vrot.lane.b32.xlu0 %v390, 49
        %v690 = vpop.permute.xlu0 %689
        %691 = vrot.lane.b32.xlu0 %v391, 49
        %v692 = vpop.permute.xlu0 %691
        %vm693 = vcmask 400384
        %v694 = vsel %vm693, %v684, %v686
        %v695 = vsel %vm693, %v686, %v688
        %v696 = vsel %vm693, %v688, %v690
        %v697 = vsel %vm693, %v690, %v692
        %698 = vrot.lane.b32.xlu0 %v387, 48
        %v699 = vpop.permute.xlu0 %698
        %700 = vrot.lane.b32.xlu0 %v388, 48
        %v701 = vpop.permute.xlu0 %700
        %702 = vrot.lane.b32.xlu0 %v389, 48
        %v703 = vpop.permute.xlu0 %702
        %704 = vrot.lane.b32.xlu0 %v390, 48
        %v705 = vpop.permute.xlu0 %704
        %706 = vrot.lane.b32.xlu0 %v391, 48
        %v707 = vpop.permute.xlu0 %706
        %vm708 = vcmask 392192
        %v709 = vsel %vm708, %v699, %v701
        %v710 = vsel %vm708, %v701, %v703
        %v711 = vsel %vm708, %v703, %v705
        %v712 = vsel %vm708, %v705, %v707
        %713 = vrot.lane.b32.xlu0 %v387, 47
        %v714 = vpop.permute.xlu0 %713
        %715 = vrot.lane.b32.xlu0 %v388, 47
        %v716 = vpop.permute.xlu0 %715
        %717 = vrot.lane.b32.xlu0 %v389, 47
        %v718 = vpop.permute.xlu0 %717
        %719 = vrot.lane.b32.xlu0 %v390, 47
        %v720 = vpop.permute.xlu0 %719
        %721 = vrot.lane.b32.xlu0 %v391, 47
        %v722 = vpop.permute.xlu0 %721
        %vm723 = vcmask 384000
        %v724 = vsel %vm723, %v714, %v716
        %v725 = vsel %vm723, %v716, %v718
        %v726 = vsel %vm723, %v718, %v720
        %v727 = vsel %vm723, %v720, %v722
        %728 = vrot.lane.b32.xlu0 %v387, 39
        %v729 = vpop.permute.xlu0 %728
        %730 = vrot.lane.b32.xlu0 %v388, 39
        %v731 = vpop.permute.xlu0 %730
        %732 = vrot.lane.b32.xlu0 %v389, 39
        %v733 = vpop.permute.xlu0 %732
        %734 = vrot.lane.b32.xlu0 %v390, 39
        %v735 = vpop.permute.xlu0 %734
        %736 = vrot.lane.b32.xlu0 %v391, 39
        %v737 = vpop.permute.xlu0 %736
        %vm738 = vcmask 318464
        %v739 = vsel %vm738, %v729, %v731
        %v740 = vsel %vm738, %v731, %v733
        %v741 = vsel %vm738, %v733, %v735
        %v742 = vsel %vm738, %v735, %v737
        %743 = vrot.lane.b32.xlu0 %v387, 38
        %v744 = vpop.permute.xlu0 %743
        %745 = vrot.lane.b32.xlu0 %v388, 38
        %v746 = vpop.permute.xlu0 %745
        %747 = vrot.lane.b32.xlu0 %v389, 38
        %v748 = vpop.permute.xlu0 %747
        %749 = vrot.lane.b32.xlu0 %v390, 38
        %v750 = vpop.permute.xlu0 %749
        %751 = vrot.lane.b32.xlu0 %v391, 38
        %v752 = vpop.permute.xlu0 %751
        %vm753 = vcmask 310272
        %v754 = vsel %vm753, %v744, %v746
        %v755 = vsel %vm753, %v746, %v748
        %v756 = vsel %vm753, %v748, %v750
        %v757 = vsel %vm753, %v750, %v752
        %758 = vrot.lane.b32.xlu0 %v387, 37
        %v759 = vpop.permute.xlu0 %758
        %760 = vrot.lane.b32.xlu0 %v388, 37
        %v761 = vpop.permute.xlu0 %760
        %762 = vrot.lane.b32.xlu0 %v389, 37
        %v763 = vpop.permute.xlu0 %762
        %764 = vrot.lane.b32.xlu0 %v390, 37
        %v765 = vpop.permute.xlu0 %764
        %766 = vrot.lane.b32.xlu0 %v391, 37
        %v767 = vpop.permute.xlu0 %766
        %vm768 = vcmask 302080
        %v769 = vsel %vm768, %v759, %v761
        %v770 = vsel %vm768, %v761, %v763
        %v771 = vsel %vm768, %v763, %v765
        %v772 = vsel %vm768, %v765, %v767
        %773 = vrot.lane.b32.xlu0 %v387, 29
        %v774 = vpop.permute.xlu0 %773
        %775 = vrot.lane.b32.xlu0 %v388, 29
        %v776 = vpop.permute.xlu0 %775
        %777 = vrot.lane.b32.xlu0 %v389, 29
        %v778 = vpop.permute.xlu0 %777
        %779 = vrot.lane.b32.xlu0 %v390, 29
        %v780 = vpop.permute.xlu0 %779
        %781 = vrot.lane.b32.xlu0 %v391, 29
        %v782 = vpop.permute.xlu0 %781
        %vm783 = vcmask 236544
        %v784 = vsel %vm783, %v774, %v776
        %v785 = vsel %vm783, %v776, %v778
        %v786 = vsel %vm783, %v778, %v780
        %v787 = vsel %vm783, %v780, %v782
        %788 = vrot.lane.b32.xlu0 %v391, 28
        %v789 = vpop.permute.xlu0 %788
        %v790 = vsel %vm559, %v558, %v789
        %791 = vrot.lane.b32.xlu0 %v391, 27
        %v792 = vpop.permute.xlu0 %791
        %v793 = vsel %vm578, %v577, %v792
        %794 = vrot.lane.b32.xlu0 %v386, 7
        %v795 = vpop.permute.xlu0 %794
        %796 = vrot.lane.b32.xlu0 %v387, 7
        %v797 = vpop.permute.xlu0 %796
        %798 = vrot.lane.b32.xlu0 %v388, 7
        %v799 = vpop.permute.xlu0 %798
        %800 = vrot.lane.b32.xlu0 %v389, 7
        %v801 = vpop.permute.xlu0 %800
        %802 = vrot.lane.b32.xlu0 %v390, 7
        %v803 = vpop.permute.xlu0 %802
        %804 = vrot.lane.b32.xlu0 %v408, 7
        %v805 = vpop.permute.xlu0 %804
        %806 = vrot.lane.b32.xlu0 %v409, 7
        %v807 = vpop.permute.xlu0 %806
        %808 = vrot.lane.b32.xlu0 %v410, 7
        %v809 = vpop.permute.xlu0 %808
        %810 = vrot.lane.b32.xlu0 %v411, 7
        %v811 = vpop.permute.xlu0 %810
        %812 = vrot.lane.b32.xlu0 %v406, 7
        %v813 = vpop.permute.xlu0 %812
        %814 = vrot.lane.b32.xlu0 %v684, 7
        %v815 = vpop.permute.xlu0 %814
        %816 = vrot.lane.b32.xlu0 %v694, 7
        %v817 = vpop.permute.xlu0 %816
        %818 = vrot.lane.b32.xlu0 %v695, 7
        %v819 = vpop.permute.xlu0 %818
        %820 = vrot.lane.b32.xlu0 %v696, 7
        %v821 = vpop.permute.xlu0 %820
        %822 = vrot.lane.b32.xlu0 %v697, 7
        %v823 = vpop.permute.xlu0 %822
        %824 = vrot.lane.b32.xlu0 %v699, 7
        %v825 = vpop.permute.xlu0 %824
        %826 = vrot.lane.b32.xlu0 %v709, 7
        %v827 = vpop.permute.xlu0 %826
        %828 = vrot.lane.b32.xlu0 %v710, 7
        %v829 = vpop.permute.xlu0 %828
        %830 = vrot.lane.b32.xlu0 %v711, 7
        %v831 = vpop.permute.xlu0 %830
        %832 = vrot.lane.b32.xlu0 %v712, 7
        %v833 = vpop.permute.xlu0 %832
        %834 = vrot.lane.b32.xlu0 %v714, 7
        %v835 = vpop.permute.xlu0 %834
        %836 = vrot.lane.b32.xlu0 %v724, 7
        %v837 = vpop.permute.xlu0 %836
        %838 = vrot.lane.b32.xlu0 %v725, 7
        %v839 = vpop.permute.xlu0 %838
        %840 = vrot.lane.b32.xlu0 %v726, 7
        %v841 = vpop.permute.xlu0 %840
        %842 = vrot.lane.b32.xlu0 %v727, 7
        %v843 = vpop.permute.xlu0 %842
        %844 = vrot.lane.b32.xlu0 %v729, 7
        %v845 = vpop.permute.xlu0 %844
        %846 = vrot.lane.b32.xlu0 %v739, 7
        %v847 = vpop.permute.xlu0 %846
        %848 = vrot.lane.b32.xlu0 %v740, 7
        %v849 = vpop.permute.xlu0 %848
        %850 = vrot.lane.b32.xlu0 %v741, 7
        %v851 = vpop.permute.xlu0 %850
        %852 = vrot.lane.b32.xlu0 %v742, 7
        %v853 = vpop.permute.xlu0 %852
        %854 = vrot.lane.b32.xlu0 %v744, 7
        %v855 = vpop.permute.xlu0 %854
        %856 = vrot.lane.b32.xlu0 %v754, 7
        %v857 = vpop.permute.xlu0 %856
        %858 = vrot.lane.b32.xlu0 %v755, 7
        %v859 = vpop.permute.xlu0 %858
        %860 = vrot.lane.b32.xlu0 %v756, 7
        %v861 = vpop.permute.xlu0 %860
        %862 = vrot.lane.b32.xlu0 %v757, 7
        %v863 = vpop.permute.xlu0 %862
        %864 = vrot.lane.b32.xlu0 %v759, 7
        %v865 = vpop.permute.xlu0 %864
        %866 = vrot.lane.b32.xlu0 %v769, 7
        %v867 = vpop.permute.xlu0 %866
        %868 = vrot.lane.b32.xlu0 %v770, 7
        %v869 = vpop.permute.xlu0 %868
        %870 = vrot.lane.b32.xlu0 %v771, 7
        %v871 = vpop.permute.xlu0 %870
        %872 = vrot.lane.b32.xlu0 %v772, 7
        %v873 = vpop.permute.xlu0 %872
        %874 = vrot.lane.b32.xlu0 %v774, 7
        %v875 = vpop.permute.xlu0 %874
        %876 = vrot.lane.b32.xlu0 %v784, 7
        %v877 = vpop.permute.xlu0 %876
        %878 = vrot.lane.b32.xlu0 %v785, 7
        %v879 = vpop.permute.xlu0 %878
        %880 = vrot.lane.b32.xlu0 %v786, 7
        %v881 = vpop.permute.xlu0 %880
        %882 = vrot.lane.b32.xlu0 %v787, 7
        %v883 = vpop.permute.xlu0 %882
        %884 = vrot.lane.b32.xlu0 %v552, 7
        %v885 = vpop.permute.xlu0 %884
        %886 = vrot.lane.b32.xlu0 %v561, 7
        %v887 = vpop.permute.xlu0 %886
        %888 = vrot.lane.b32.xlu0 %v562, 7
        %v889 = vpop.permute.xlu0 %888
        %890 = vrot.lane.b32.xlu0 %v563, 7
        %v891 = vpop.permute.xlu0 %890
        %892 = vrot.lane.b32.xlu0 %v790, 7
        %v893 = vpop.permute.xlu0 %892
        %894 = vrot.lane.b32.xlu0 %v571, 7
        %v895 = vpop.permute.xlu0 %894
        %896 = vrot.lane.b32.xlu0 %v580, 7
        %v897 = vpop.permute.xlu0 %896
        %898 = vrot.lane.b32.xlu0 %v581, 7
        %v899 = vpop.permute.xlu0 %898
        %900 = vrot.lane.b32.xlu0 %v582, 7
        %v901 = vpop.permute.xlu0 %900
        %902 = vrot.lane.b32.xlu0 %v793, 7
        %v903 = vpop.permute.xlu0 %902
        %vm904 = vcmask 56320
        %v905 = vsel %vm904, %v795, %v797
        %v906 = vsel %vm904, %v797, %v799
        %v907 = vsel %vm904, %v799, %v801
        %v908 = vsel %vm904, %v801, %v803
        %v909 = vsel %vm904, %v805, %v807
        %v910 = vsel %vm904, %v807, %v809
        %v911 = vsel %vm904, %v809, %v811
        %v912 = vsel %vm904, %v811, %v813
        %v913 = vsel %vm904, %v815, %v817
        %v914 = vsel %vm904, %v817, %v819
        %v915 = vsel %vm904, %v819, %v821
        %v916 = vsel %vm904, %v821, %v823
        %v917 = vsel %vm904, %v825, %v827
        %v918 = vsel %vm904, %v827, %v829
        %v919 = vsel %vm904, %v829, %v831
        %v920 = vsel %vm904, %v831, %v833
        %v921 = vsel %vm904, %v835, %v837
        %v922 = vsel %vm904, %v837, %v839
        %v923 = vsel %vm904, %v839, %v841
        %v924 = vsel %vm904, %v841, %v843
        %v925 = vsel %vm904, %v845, %v847
        %v926 = vsel %vm904, %v847, %v849
        %v927 = vsel %vm904, %v849, %v851
        %v928 = vsel %vm904, %v851, %v853
        %v929 = vsel %vm904, %v855, %v857
        %v930 = vsel %vm904, %v857, %v859
        %v931 = vsel %vm904, %v859, %v861
        %v932 = vsel %vm904, %v861, %v863
        %v933 = vsel %vm904, %v865, %v867
        %v934 = vsel %vm904, %v867, %v869
        %v935 = vsel %vm904, %v869, %v871
        %v936 = vsel %vm904, %v871, %v873
        %v937 = vsel %vm904, %v875, %v877
        %v938 = vsel %vm904, %v877, %v879
        %v939 = vsel %vm904, %v879, %v881
        %v940 = vsel %vm904, %v881, %v883
        %v941 = vsel %vm904, %v885, %v887
        %v942 = vsel %vm904, %v887, %v889
        %v943 = vsel %vm904, %v889, %v891
        %v944 = vsel %vm904, %v891, %v893
        %v945 = vsel %vm904, %v895, %v897
        %v946 = vsel %vm904, %v897, %v899
        %v947 = vsel %vm904, %v899, %v901
        %v948 = vsel %vm904, %v901, %v903
        %v993 = vld [vmem:[%s3] sm:$0xff]
        %v994 = vld [vmem:[%s3 + $0x8] sm:$0xff]
        %vm995 = vcmask 719872
        %v997 = vsel %vm995, %v994, 0
        %999 = vmatpush.msra.mxu0 %v674
        %1000 = vmatpush.msra.mxu0 %v655
        %1001 = vmatpush.msra.mxu0 %v636
        %1002 = vmatpush.msra.mxu0 %v617
        %1003 = vmatpush.msra.mxu0 %v598
        %1004 = vmatpush.msra.mxu0 %v579
        %1005 = vmatpush.msra.mxu0 %v560
        %1006 = vmatpush.msra.mxu0 %v541
        %1007 = vmatpush.msra.mxu0 %v522
        %1008 = vmatpush.msra.mxu0 %v503
        %1009 = vmatpush.msra.mxu0 %v484
        %1010 = vmatpush.msra.mxu0 %v465
        %1011 = vmatpush.msra.mxu0 %v446
        %1012 = vmatpush.msra.mxu0 %v427
        %1013 = vmatpush.msra.mxu0 %v408
        %1014 = vmatpush.msra.mxu0 %v386
        %1015 = vmatmul.f32.gmra.mxu0 %v993
        %v1016 = vpop.f32.mrf.mxu0
        %v1017 = vadd.f32 0.0, %v1016
        %1018 = vdwg.mxu0
        %1019 = vmatpush.msra.mxu0 0.0
        %1020 = vmatpush.msra.mxu0 0.0
        %1021 = vmatpush.msra.mxu0 0.0
        %1022 = vmatpush.msra.mxu0 0.0
        %1023 = vmatpush.msra.mxu0 0.0
        %1024 = vmatpush.msra.mxu0 %v945
        %1025 = vmatpush.msra.mxu0 %v941
        %1026 = vmatpush.msra.mxu0 %v937
        %1027 = vmatpush.msra.mxu0 %v933
        %1028 = vmatpush.msra.mxu0 %v929
        %1029 = vmatpush.msra.mxu0 %v925
        %1030 = vmatpush.msra.mxu0 %v921
        %1031 = vmatpush.msra.mxu0 %v917
        %1032 = vmatpush.msra.mxu0 %v913
        %1033 = vmatpush.msra.mxu0 %v909
        %1034 = vmatpush.msra.mxu0 %v905
        %1035 = vmatmul.f32.gmra.mxu0 %v997
        %v1036 = vpop.f32.mrf.mxu0
        %v1037 = vadd.f32 %v1017, %v1036
        %1038 = vdwg.mxu0
        %1039 = vmatpush.msra.mxu0 %v675
        %1040 = vmatpush.msra.mxu0 %v656
        %1041 = vmatpush.msra.mxu0 %v637
        %1042 = vmatpush.msra.mxu0 %v618
        %1043 = vmatpush.msra.mxu0 %v599
        %1044 = vmatpush.msra.mxu0 %v580
        %1045 = vmatpush.msra.mxu0 %v561
        %1046 = vmatpush.msra.mxu0 %v542
        %1047 = vmatpush.msra.mxu0 %v523
        %1048 = vmatpush.msra.mxu0 %v504
        %1049 = vmatpush.msra.mxu0 %v485
        %1050 = vmatpush.msra.mxu0 %v466
        %1051 = vmatpush.msra.mxu0 %v447
        %1052 = vmatpush.msra.mxu0 %v428
        %1053 = vmatpush.msra.mxu0 %v409
        %1054 = vmatpush.msra.mxu0 %v387
        %1055 = vmatmul.f32.gmra.mxu0 %v993
        %v1056 = vpop.f32.mrf.mxu0
        %v1057 = vadd.f32 0.0, %v1056
        %1058 = vdwg.mxu0
        %1059 = vmatpush.msra.mxu0 0.0
        %1060 = vmatpush.msra.mxu0 0.0
        %1061 = vmatpush.msra.mxu0 0.0
        %1062 = vmatpush.msra.mxu0 0.0
        %1063 = vmatpush.msra.mxu0 0.0
        %1064 = vmatpush.msra.mxu0 %v946
        %1065 = vmatpush.msra.mxu0 %v942
        %1066 = vmatpush.msra.mxu0 %v938
        %1067 = vmatpush.msra.mxu0 %v934
        %1068 = vmatpush.msra.mxu0 %v930
        %1069 = vmatpush.msra.mxu0 %v926
        %1070 = vmatpush.msra.mxu0 %v922
        %1071 = vmatpush.msra.mxu0 %v918
        %1072 = vmatpush.msra.mxu0 %v914
        %1073 = vmatpush.msra.mxu0 %v910
        %1074 = vmatpush.msra.mxu0 %v906
        %1075 = vmatmul.f32.gmra.mxu0 %v997
        %v1076 = vpop.f32.mrf.mxu0
        %v1077 = vadd.f32 %v1057, %v1076
        %1078 = vdwg.mxu0
        %1079 = vmatpush.msra.mxu0 %v676
        %1080 = vmatpush.msra.mxu0 %v657
        %1081 = vmatpush.msra.mxu0 %v638
        %1082 = vmatpush.msra.mxu0 %v619
        %1083 = vmatpush.msra.mxu0 %v600
        %1084 = vmatpush.msra.mxu0 %v581
        %1085 = vmatpush.msra.mxu0 %v562
        %1086 = vmatpush.msra.mxu0 %v543
        %1087 = vmatpush.msra.mxu0 %v524
        %1088 = vmatpush.msra.mxu0 %v505
        %1089 = vmatpush.msra.mxu0 %v486
        %1090 = vmatpush.msra.mxu0 %v467
        %1091 = vmatpush.msra.mxu0 %v448
        %1092 = vmatpush.msra.mxu0 %v429
        %1093 = vmatpush.msra.mxu0 %v410
        %1094 = vmatpush.msra.mxu0 %v388
        %1095 = vmatmul.f32.gmra.mxu0 %v993
        %v1096 = vpop.f32.mrf.mxu0
        %v1097 = vadd.f32 0.0, %v1096
        %1098 = vdwg.mxu0
        %1099 = vmatpush.msra.mxu0 0.0
        %1100 = vmatpush.msra.mxu0 0.0
        %1101 = vmatpush.msra.mxu0 0.0
        %1102 = vmatpush.msra.mxu0 0.0
        %1103 = vmatpush.msra.mxu0 0.0
        %1104 = vmatpush.msra.mxu0 %v947
        %1105 = vmatpush.msra.mxu0 %v943
        %1106 = vmatpush.msra.mxu0 %v939
        %1107 = vmatpush.msra.mxu0 %v935
        %1108 = vmatpush.msra.mxu0 %v931
        %1109 = vmatpush.msra.mxu0 %v927
        %1110 = vmatpush.msra.mxu0 %v923
        %1111 = vmatpush.msra.mxu0 %v919
        %1112 = vmatpush.msra.mxu0 %v915
        %1113 = vmatpush.msra.mxu0 %v911
        %1114 = vmatpush.msra.mxu0 %v907
        %1115 = vmatmul.f32.gmra.mxu0 %v997
        %v1116 = vpop.f32.mrf.mxu0
        %v1117 = vadd.f32 %v1097, %v1116
        %1118 = vdwg.mxu0
        %1119 = vmatpush.msra.mxu0 %v677
        %1120 = vmatpush.msra.mxu0 %v658
        %1121 = vmatpush.msra.mxu0 %v639
        %1122 = vmatpush.msra.mxu0 %v620
        %1123 = vmatpush.msra.mxu0 %v601
        %1124 = vmatpush.msra.mxu0 %v582
        %1125 = vmatpush.msra.mxu0 %v563
        %1126 = vmatpush.msra.mxu0 %v544
        %1127 = vmatpush.msra.mxu0 %v525
        %1128 = vmatpush.msra.mxu0 %v506
        %1129 = vmatpush.msra.mxu0 %v487
        %1130 = vmatpush.msra.mxu0 %v468
        %1131 = vmatpush.msra.mxu0 %v449
        %1132 = vmatpush.msra.mxu0 %v430
        %1133 = vmatpush.msra.mxu0 %v411
        %1134 = vmatpush.msra.mxu0 %v389
        %1135 = vmatmul.f32.gmra.mxu0 %v993
        %v1136 = vpop.f32.mrf.mxu0
        %v1137 = vadd.f32 0.0, %v1136
        %1138 = vdwg.mxu0
        %1139 = vmatpush.msra.mxu0 0.0
        %1140 = vmatpush.msra.mxu0 0.0
        %1141 = vmatpush.msra.mxu0 0.0
        %1142 = vmatpush.msra.mxu0 0.0
        %1143 = vmatpush.msra.mxu0 0.0
        %1144 = vmatpush.msra.mxu0 %v948
        %1145 = vmatpush.msra.mxu0 %v944
        %1146 = vmatpush.msra.mxu0 %v940
        %1147 = vmatpush.msra.mxu0 %v936
        %1148 = vmatpush.msra.mxu0 %v932
        %1149 = vmatpush.msra.mxu0 %v928
        %1150 = vmatpush.msra.mxu0 %v924
        %1151 = vmatpush.msra.mxu0 %v920
        %1152 = vmatpush.msra.mxu0 %v916
        %1153 = vmatpush.msra.mxu0 %v912
        %1154 = vmatpush.msra.mxu0 %v908
        %1155 = vmatmul.f32.gmra.mxu0 %v997
        %v1156 = vpop.f32.mrf.mxu0
        %v1157 = vadd.f32 %v1137, %v1156
        %1158 = vdwg.mxu0
        %p1159 = scmp.eq.s32.totalorder %s32, 0
        %p1160 = scmp.eq.s32.totalorder %s33, 0
        %p1161 = pnand %p1159, %p1160
        %p1162 = pneg %p1161
        // Predicated region
        $region57: #{tpu_custom_call.1} parent=43 // pred_check
          _
        $region58: #{tpu_custom_call.1} parent=43 // pred_check_branch
          %1164 = sbr.rel (%p1161) target = $region60
        $region59: #{tpu_custom_call.1} parent=43 // pred_region
          %vm1165 = vcmask 7168
          %1166 = vst.msk [vmem:[#allocation2] sm:$0xff] %vm1165, 0.0
          %1167 = vst.msk [vmem:[#allocation3] sm:$0xff] %vm1165, 0.0
        $region60: #{tpu_custom_call.1} parent=43 // pred_fallthru
          _
        // Predicated region
        $region61: #{tpu_custom_call.1} parent=43 // pred_check
          %p1168 = pneg %p1159
        $region62: #{tpu_custom_call.1} parent=43 // pred_check_branch
          %1170 = sbr.rel (%p1168) target = $region64
        $region63: #{tpu_custom_call.1} parent=43 // pred_region
          %v1171 = vld [vmem:[%s320] sm:$0xf]
          %v1173 = vperm.slane %v1171, 0
          %v1174 = vperm.slane %v1171, 1
          %v1175 = vperm.slane %v1171, 2
          %v1176 = vperm.slane %v1171, 3
          %v1181 = vmul.f32 %v1037, %v1173
          %v1182 = vmul.f32 %v1077, %v1174
          %v1183 = vmul.f32 %v1117, %v1175
          %v1184 = vmul.f32 %v1157, %v1176
          %v1185 = vld [vmem:[#allocation2] sm:$0xff]
          %v1186 = vadd.f32 %v1181, %v1182
          %v1187 = vadd.f32 %v1186, %v1183
          %v1188 = vadd.f32 %v1187, %v1184
          %1189 = vadd.xlane.f32.xlu0 %v1188
          %v1190 = vpop.xlane.xlu0 %1189
          %v1191 = vadd.f32 %v1185, %v1190
          %vm1192 = vcmask 7168
          %1193 = vst.msk [vmem:[#allocation2] sm:$0xff] %vm1192, %v1191
          %v1194 = vld [vmem:[#allocation3] sm:$0xff]
          %v1195 = vmul.f32 %v1181, %v1037
          %v1196 = vmul.f32 %v1182, %v1077
          %v1197 = vmul.f32 %v1183, %v1117
          %v1198 = vmul.f32 %v1184, %v1157
          %v1199 = vadd.f32 %v1195, %v1196
          %v1200 = vadd.f32 %v1199, %v1197
          %v1201 = vadd.f32 %v1200, %v1198
          %1202 = vadd.xlane.f32.xlu0 %v1201
          %v1203 = vpop.xlane.xlu0 %1202
          %v1204 = vadd.f32 %v1194, %v1203
          %1205 = vst.msk [vmem:[#allocation3] sm:$0xff] %vm1192, %v1204
        $region64: #{tpu_custom_call.1} parent=43 // pred_fallthru
          _
        %p1206 = scmp.eq.s32.totalorder %s32, 1
        // Predicated region
        $region65: #{tpu_custom_call.1} parent=43 // pred_check
          %p1207 = pneg %p1206
        $region66: #{tpu_custom_call.1} parent=43 // pred_check_branch
          %1209 = sbr.rel (%p1207) target = $region68
        $region67: #{tpu_custom_call.1} parent=43 // pred_region
          %v1210 = vld [vmem:[#allocation2] sm:$0xff]
          %v1211 = vmul.f32 %v1210, 0.001953125
          %v1212 = vld [vmem:[#allocation3] sm:$0xff]
          %v1213 = vmul.f32 %v1212, 0.001953125
          %v1214 = vmul.f32 %v1211, %v1211
          %v1215 = vsub.f32 %v1213, %v1214
          %v1216 = vmax.f32 %v1215, 0.0
          %v1217 = vld [vmem:[%s4] sm:$0xff]
          %v1218 = vadd.f32 %v1216, 1e-05
          %v1219 = vrsqrt.pop %v1218
          %v1220 = vmul.f32 %v1219, %v1218
          %v1221 = vmul.f32 %v1220, %v1219
          %v1222 = vmul.f32 0.5, %v1221
          %v1223 = vsub.f32 1.5, %v1222
          %v1224 = vmul.f32 %v1219, %v1223
          %vm1225 = vweird.f32 %v1218
          %vm1226 = vweird.f32 %v1219
          %vm1227 = vmor %vm1225, %vm1226
          %v1228 = vsel %vm1227, %v1219, %v1224
          %v1229 = vmul.f32 %v1217, %v1228
          %v1230 = vld [vmem:[%s5] sm:$0xff]
          %v1231 = vmul.f32 %v1211, %v1229
          %v1232 = vsub.f32 %v1230, %v1231
          %1234 = vset.pattern.permute.xlu0 0
          %1235 = vperm.xlu0 %1234, %v1229
          %v1236 = vpop.permute.xlu0 %1235
          %v1238 = vmul.f32 %v1037, %v1236
          %v1239 = vmul.f32 %v1077, %v1236
          %v1240 = vmul.f32 %v1117, %v1236
          %v1241 = vmul.f32 %v1157, %v1236
          %1243 = vset.pattern.permute.xlu0 0
          %1244 = vperm.xlu0 %1243, %v1232
          %v1245 = vpop.permute.xlu0 %1244
          %v1247 = vadd.f32 %v1238, %v1245
          %v1248 = vadd.f32 %v1239, %v1245
          %v1249 = vadd.f32 %v1240, %v1245
          %v1250 = vadd.f32 %v1241, %v1245
          %v1251 = vmax.f32 %v1247, 0.0
          %v1252 = vmax.f32 %v1248, 0.0
          %v1253 = vmax.f32 %v1249, 0.0
          %v1254 = vmax.f32 %v1250, 0.0
          %1255 = vst [vmem:[%s379] sm:$0xff] %v1251
          %1256 = vst [vmem:[%s379 + $0x8] sm:$0xff] %v1252
          %1257 = vst [vmem:[%s379 + $0x10] sm:$0xff] %v1253
          %1258 = vst [vmem:[%s379 + $0x18] sm:$0xff] %v1254
        $region68: #{tpu_custom_call.1} parent=43 // pred_fallthru
          _
        %s1259 = sand.u32 %s204, 1
        %s1260 = scalar_lea.sflag [#allocation6], %s1259
        %s1261 = sand.u32 %s204, 1
        %s1262 = smul.addr %s1261, 32
        %s1263 = scalar_lea.vmem [#allocation10], %s1262
        // Predicated region
        $region69: #{tpu_custom_call.1} parent=43 // pred_check
          %p1264 = pneg %p214
        $region70: #{tpu_custom_call.1} parent=43 // pred_check_branch
          %1266 = sbr.rel (%p1264) target = $region72
        $region71: #{tpu_custom_call.1} parent=43 // pred_region
          %s1267 = smul.u32 %s33, %s32
          %s1268 = smul.u32 4, %s1267
          %1270 = vsyncadd %s1260, 0
          %s1271 = smul.addr %s31, 8
          %s1272 = sadd.s32 %s1268, %s1271
          %s1273 = smul.addr %s1272, 8
          %s1274 = scalar_lea.hbm %s6, %s1273
          %s1276 = sshll.u32 %s1263, 4
          %s1277 = int_to_ptr.vmem [resolvable:$true] %s1276
          %s1278 = sshll.u32 %s1274, 4
          %s1279 = int_to_ptr.hbm [resolvable:$true] %s1278
          %1281 = dma.vmem_to_hbm [thread:$0]  %s1277, 512, %s1279, %s1260
        $region72: #{tpu_custom_call.1} parent=43 // pred_fallthru
          _
      $region44: #{tpu_custom_call.1} parent=5 // pred_fallthru
        _
      %p1282 = scmp.le.s32.totalorder 2, %s21
      // Predicated region
      $region73: #{tpu_custom_call.1} parent=5 // pred_check
        %p1283 = pneg %p1282
      $region74: #{tpu_custom_call.1} parent=5 // pred_check_branch
        %1285 = sbr.rel (%p1283) target = $region76
      $region75: #{tpu_custom_call.1} parent=5 // pred_region
        %s1286 = ssub.s32 %s21, 2
        // Predicated region
        $region77: #{tpu_custom_call.1} parent=75 // pred_check
          %p1287 = pneg %p220
        $region78: #{tpu_custom_call.1} parent=75 // pred_check_branch
          %1289 = sbr.rel (%p1287) target = $region80
        $region79: #{tpu_custom_call.1} parent=75 // pred_region
          %s1290 = sand.u32 %s205, 1
          %s1291 = scalar_lea.sflag [#allocation6], %s1290
          %s1292 = sand.u32 %s205, 1
          %s1293 = smul.addr %s1292, 32
          %s1294 = scalar_lea.vmem [#allocation10], %s1293
          %1296 = dma.done %s1291, 512
        $region80: #{tpu_custom_call.1} parent=75 // pred_fallthru
          _
      $region76: #{tpu_custom_call.1} parent=5 // pred_fallthru
        _
    $region6: #{tpu_custom_call.1} parent=1 // loop_footer
      %s25 = sadd.s32 1, %s21
    $region7: #{tpu_custom_call.1} parent=1 // loop_footer_branch
      %20 = sbr.rel target = $region3
    $region8: #{tpu_custom_call.1} parent=1 // loop_exit
      _
    %1297 = vsyncpa [#allocation5], 1
    %s1298 = scalar_lea.sflag [#allocation5], 1
    %1299 = vsyncpa %s1298, 1
    %1300 = vsyncpa [#allocation8], 1
    %s1301 = scalar_lea.sflag [#allocation8], 1
    %1302 = vsyncpa %s1301, 1
    %1303 = vsyncpa [#allocation6], 1
    %s1304 = scalar_lea.sflag [#allocation6], 1
    %1305 = vsyncpa %s1304, 1

</llo_original>
